<compile_context>
chip_gen: v6e
topology: v6e:2x2x1
jax: 0.10.0
libtpu: 0.0.40
codegen_flags: <defaults>
</compile_context>

<pallas_src>
import functools
import math

import jax
import jax.numpy as jnp
from jax.experimental import pallas as pl
from jax.experimental.pallas import tpu as pltpu


# ----------------------------------------------------------------------------
# Static helpers
# ----------------------------------------------------------------------------
def _bias_layout(I, H, L, G, A):
    """Packed bias row: one (1, total) array, segments 128-lane aligned."""
    segs = (
        ("in", 2 * L + H + 4 * G),     # [embed mu|logsig | fc1 | hg_fc1 (x-part incl. bias)]
        ("gru_ih", 3 * H),
        ("gru_hh", 3 * H),
        ("lat1", 4 * L),
        ("lat2", 4 * L),
        ("lat_out", A * H + A),        # [fc2_w (action-major) | fc2_b]
        ("hg2", 2 * G),
        ("enc1", 4 * L),
        ("enc2", 2 * L),
        ("dec1", G),
        ("dec2", 2 * G),
    )
    layout, off = {}, 0
    for name, ln in segs:
        layout[name] = (off, ln)
        off += -(-ln // 128) * 128
    return layout, off


def _pick_tile_b(B, target_shards=2, max_tile=8192):
    """Largest multiple of 8 dividing B, capped at max(8, B/target_shards) and max_tile."""
    if B % 8 != 0:
        return B
    cap = min(max_tile, max(8, -(-B // max(1, target_shards))))
    tb = (cap // 8) * 8
    while tb >= 8 and B % tb != 0:
        tb -= 8
    return tb if tb >= 8 else B


# ----------------------------------------------------------------------------
# Pallas kernel (one (batch tile, time step) per grid point)
# ----------------------------------------------------------------------------
def _latent_vae_rnn_kernel(
    H, L, G, A, ce_w, rec_w, blay,
    # data
    x_ref, hin_ref, eps_ref,
    # packed params (12 merged weights + 1 packed bias row)
    w_in, w_gih, w_ghh, w_l1, w_l2, w_lo,
    w_hg1h, w_hg2, w_e1, w_e2, w_d1, w_d2, b_ref,
    # outputs
    qhl_ref, hfin_ref,
):
    f32 = jnp.float32
    t = pl.program_id(1)

    def bias(name):
        off, ln = blay[name]
        return b_ref[0:1, off:off + ln]          # 128-aligned lane slice

    def lin(x, w_ref, name):
        w = w_ref[...]
        y = jnp.dot(x.astype(w.dtype), w, preferred_element_type=f32)
        return y + bias(name)

    x_in = x_ref[0]                              # (Bt, I)
    eps = eps_ref[0]                             # (Bt, 2L+G) = [eps_e | eps_hg | eps_z]

    # hidden-state carry lives in the resident (const-index-over-T) output block
    @pl.when(t == 0)
    def _():
        hfin_ref[...] = hin_ref[...]
    h_prev = hfin_ref[...]                       # (Bt, H)

    # -- fused input-side matmul: [embed mu|logsig (2L) | fc1 (H) | hg1_x (4G)] --
    t_in = lin(x_in, w_in, "in")
    mu_e = t_in[:, :L]
    logsig_e = t_in[:, L:2 * L]
    x1 = jnp.maximum(t_in[:, 2 * L:2 * L + H], 0.0)
    hg_x = t_in[:, 2 * L + H:]                   # x half of hg_fc1 (+ its bias)
    sig_e = jnp.exp(logsig_e)
    lat = mu_e + sig_e * eps[:, :L]              # embed rsample

    # -- latent hyper-network (fc2_w | fc2_b heads merged, action-major flat) ----
    lat = jnp.maximum(lin(lat, w_l1, "lat1"), 0.0)
    lat = lin(lat, w_l2, "lat2")
    lat_out = lin(lat, w_lo, "lat_out")          # (Bt, A*H + A)

    # -- GRUCell (single 3H-wide ih / hh matmuls, gate order r, z, n) ------------
    gi = lin(x1, w_gih, "gru_ih")
    gh = lin(h_prev, w_ghh, "gru_hh")
    r = jax.nn.sigmoid(gi[:, :H] + gh[:, :H])
    zg = jax.nn.sigmoid(gi[:, H:2 * H] + gh[:, H:2 * H])
    n = jnp.tanh(gi[:, 2 * H:] + r * gh[:, 2 * H:])
    h = (1.0 - zg) * n + zg * h_prev
    hfin_ref[...] = h

    # -- per-sample q = h @ W_b + b_b  (A lane reductions on the action-major flat)
    q = jnp.concatenate(
        [jnp.sum(h * lat_out[:, a * H:(a + 1) * H], axis=-1, keepdims=True)
         for a in range(A)], axis=-1) + lat_out[:, A * H:]

    # -- hg encoder on cat([h, x]) (x half already folded into the fused matmul) -
    hg = jnp.maximum(
        jnp.dot(h.astype(w_hg1h.dtype), w_hg1h[...],
                preferred_element_type=f32) + hg_x, 0.0)
    hg2 = lin(hg, w_hg2, "hg2")                  # (Bt, 2G) = mu | logsig
    mu_hg, logsig_hg = hg2[:, :G], hg2[:, G:]
    sig_hg = jnp.exp(logsig_hg)
    hg_s = mu_hg + sig_hg * eps[:, L:L + G]      # rsample

    # -- z inference encoder -----------------------------------------------------
    enc = jnp.maximum(lin(hg_s, w_e1, "enc1"), 0.0)
    enc2 = lin(enc, w_e2, "enc2")                # (Bt, 2L)
    mu_z, logsig_z = enc2[:, :L], enc2[:, L:]
    sig_z = jnp.exp(logsig_z)
    z_s = mu_z + sig_z * eps[:, L + G:]          # rsample

    # -- decoder -------------------------------------------------------------------
    dec = jnp.maximum(lin(z_s, w_d1, "dec1"), 0.0)
    dec2 = lin(dec, w_d2, "dec2")                # (Bt, 2G)
    mu_d, logsig_d = dec2[:, :G], dec2[:, G:]

    # -- per-row loss (entropy + CE-KL fused elementwise; reconstruction KL) -------
    half_log_2pi = 0.5 * math.log(2.0 * math.pi)
    ce_elem = (half_log_2pi + logsig_z
               + 0.5 * (sig_e * sig_e + (mu_e - mu_z) ** 2)
               * jnp.exp(-2.0 * logsig_z))
    rec_elem = (logsig_d - logsig_hg
                + 0.5 * (sig_hg * sig_hg + (mu_hg - mu_d) ** 2)
                * jnp.exp(-2.0 * logsig_d) - 0.5)
    loss_rows = (ce_w * jnp.sum(ce_elem, axis=-1, keepdims=True)
                 + rec_w * jnp.sum(rec_elem, axis=-1, keepdims=True))   # (Bt, 1)

    # lane-contiguous output slab: [q (A) | h (H) | per-row loss (1)]
    qhl_ref[0] = jnp.concatenate([q, h, loss_rows], axis=-1)


# ----------------------------------------------------------------------------
# Wrappers
# ----------------------------------------------------------------------------
def latent_vae_rnn_forward_sequence(
        inputs, hidden, eps_e, eps_hg, eps_z, kparams, *,
        hidden_dim, latent_dim, hg_dim, n_actions,
        ce_loss_weight, rec_loss_weight, loss_div,
        tile_b=None, target_batch_shards=2):
    """T-step rollout in one pallas_call. inputs/eps_*: (T, B, ...); hidden: (B, H)."""
    T, B, I = inputs.shape
    H, L, G, A = hidden_dim, latent_dim, hg_dim, n_actions
    QHL = A + H + 1

    eps = jnp.concatenate([eps_e, eps_hg, eps_z], axis=-1)     # (T, B, 2L+G)

    if tile_b is None:
        tile_b = _pick_tile_b(B, target_batch_shards)
    assert B % tile_b == 0 and (tile_b == B or tile_b % 8 == 0)
    nb = B // tile_b
    grid = (nb, T)

    blay, _ = _bias_layout(I, H, L, G, A)
    kernel = functools.partial(_latent_vae_rnn_kernel, H, L, G, A,
                               float(ce_loss_weight), float(rec_loss_weight), blay)

    data_specs = [
        pl.BlockSpec((1, tile_b, I), lambda b, t: (t, b, 0)),
        pl.BlockSpec((tile_b, H), lambda b, t: (b, 0)),
        pl.BlockSpec((1, tile_b, 2 * L + G), lambda b, t: (t, b, 0)),
    ]
    # weights / packed bias row: full-array blocks, constant index_map -> VMEM resident
    param_specs = [pl.BlockSpec(p.shape, lambda b, t: (0, 0)) for p in kparams]

    out_shape = (
        jax.ShapeDtypeStruct((T, B, QHL), jnp.float32),   # [q | h | loss_row]
        jax.ShapeDtypeStruct((B, H), jnp.float32),        # final hidden state (carry)
    )
    out_specs = (
        pl.BlockSpec((1, tile_b, QHL), lambda b, t: (t, b, 0)),
        pl.BlockSpec((tile_b, H), lambda b, t: (b, 0)),   # resident across T
    )

    # Explicit VMEM limit only when the footprint exceeds v5e's 16 MiB scoped default.
    param_bytes = sum(int(p.size) * p.dtype.itemsize for p in kparams)
    step_bytes = 4 * tile_b * (I + H + (2 * L + G) + QHL + H)
    est = 2 * (param_bytes + step_bytes) + (1 << 20)
    vlim = None if est <= (12 << 20) else int(min(2 * est, 48 << 20))

    qhl, h_final = pl.pallas_call(
        kernel,
        grid=grid,
        out_shape=out_shape,
        in_specs=data_specs + param_specs,
        out_specs=out_specs,
        compiler_params=pltpu.CompilerParams(
            dimension_semantics=("parallel", "arbitrary"),
            vmem_limit_bytes=vlim),
    )(inputs, hidden, eps, *kparams)

    q = qhl[:, :, :A]
    h_seq = qhl[:, :, A:A + H]
    # Scalar epilogue: per-step batch sum, normalization, numerically stable softplus.
    loss = jax.nn.softplus(jnp.sum(qhl[:, :, A + H], axis=1) / loss_div)   # (T,)
    return q, h_seq, h_final, loss


def latent_vae_rnn_forward(inputs, hidden, eps_e, eps_hg, eps_z, kparams, **kw):
    """Single-timestep forward matching the PyTorch module's forward() signature."""
    q, h_seq, _, loss = latent_vae_rnn_forward_sequence(
        inputs[None], hidden, eps_e[None], eps_hg[None], eps_z[None], kparams, **kw)
    return q[0], h_seq[0], loss[0]


# ----------------------------------------------------------------------------
# Deterministic parameter construction (PyTorch nn.Linear-style uniform init),
# stored transposed: weight (in, out), bias (1, out).
# ----------------------------------------------------------------------------
def make_params(key, I, H, L, G, A):
    def linear(k, fan_in, fan_out):
        kw, kb = jax.random.split(k)
        bound = 1.0 / math.sqrt(fan_in)
        w = jax.random.uniform(kw, (fan_in, fan_out), jnp.float32, -bound, bound)
        b = jax.random.uniform(kb, (1, fan_out), jnp.float32, -bound, bound)
        return w, b

    ks = jax.random.split(key, 13)
    p = {}
    p["embed_fc"] = linear(ks[0], I, 2 * L)
    p["latent_fc1"] = linear(ks[1], L, 4 * L)
    p["latent_fc2"] = linear(ks[2], 4 * L, 4 * L)
    p["fc2_w_nn"] = linear(ks[3], 4 * L, H * A)     # flat h-major: flat[h*A + a]
    p["fc2_b_nn"] = linear(ks[4], 4 * L, A)
    p["fc1"] = linear(ks[5], I, H)
    # GRUCell: weight_ih/(hh) transposed to (in, 3H), gate order r, z, n
    gb = 1.0 / math.sqrt(H)
    k0, k1, k2, k3 = jax.random.split(ks[6], 4)
    p["gru"] = (
        jax.random.uniform(k0, (H, 3 * H), jnp.float32, -gb, gb),   # w_ih
        jax.random.uniform(k1, (1, 3 * H), jnp.float32, -gb, gb),   # b_ih
        jax.random.uniform(k2, (H, 3 * H), jnp.float32, -gb, gb),   # w_hh
        jax.random.uniform(k3, (1, 3 * H), jnp.float32, -gb, gb),   # b_hh
    )
    p["hg_fc1"] = linear(ks[7], H + I, 4 * G)       # acts on cat([h, x])
    p["hg_fc2"] = linear(ks[8], 4 * G, 2 * G)
    p["encoder_fc1"] = linear(ks[9], G, 4 * L)
    p["encoder_fc2"] = linear(ks[10], 4 * L, 2 * L)
    p["decoder_fc1"] = linear(ks[11], L, G)
    p["decoder_fc2"] = linear(ks[12], G, 2 * G)
    return p


# ----------------------------------------------------------------------------
# Trace-time packing of PyTorch-layout params into the kernel's merged layout.
# (weight_dtype=jnp.bfloat16 halves weight bytes / doubles MXU rate on v6e/v7x.)
# ----------------------------------------------------------------------------
def prepare_kernel_params(p, *, I, H, L, G, A, weight_dtype=jnp.float32):
    blay, btot = _bias_layout(I, H, L, G, A)

    w_emb, b_emb = p["embed_fc"]
    w_fc1, b_fc1 = p["fc1"]
    w_hg1, b_hg1 = p["hg_fc1"]                      # rows: [h | x]
    w_in = jnp.concatenate([w_emb, w_fc1, w_hg1[H:, :]], axis=1)   # (I, 2L+H+4G)
    b_in = jnp.concatenate([b_emb, b_fc1, b_hg1], axis=1)

    w_ih, b_ih, w_hh, b_hh = p["gru"]

    w_l1, b_l1 = p["latent_fc1"]
    w_l2, b_l2 = p["latent_fc2"]

    # fc2_w hyper-net: permute flat h-major (h*A + a) -> action-major (a*H + h),
    # then merge with the fc2_b head (shared LHS).
    w_f2w, b_f2w = p["fc2_w_nn"]
    j = jnp.arange(A * H)
    old_col = (j % H) * A + (j // H)
    w_f2w, b_f2w = w_f2w[:, old_col], b_f2w[:, old_col]
    w_f2b, b_f2b = p["fc2_b_nn"]
    w_lo = jnp.concatenate([w_f2w, w_f2b], axis=1)                  # (4L, A*H+A)
    b_lo = jnp.concatenate([b_f2w, b_f2b], axis=1)

    w_hg1_h = w_hg1[:H, :]
    w_hg2, b_hg2 = p["hg_fc2"]
    w_e1, b_e1 = p["encoder_fc1"]
    w_e2, b_e2 = p["encoder_fc2"]
    w_d1, b_d1 = p["decoder_fc1"]
    w_d2, b_d2 = p["decoder_fc2"]

    bias_parts = {
        "in": b_in, "gru_ih": b_ih, "gru_hh": b_hh,
        "lat1": b_l1, "lat2": b_l2, "lat_out": b_lo,
        "hg2": b_hg2, "enc1": b_e1, "enc2": b_e2, "dec1": b_d1, "dec2": b_d2,
    }
    pieces = []
    for name, (off, ln) in blay.items():
        seg = bias_parts[name].astype(jnp.float32)
        assert seg.shape == (1, ln), (name, seg.shape, ln)
        pad = -(-ln // 128) * 128 - ln
        pieces.append(jnp.pad(seg, ((0, 0), (0, pad))))
    bias_row = jnp.concatenate(pieces, axis=1)
    assert bias_row.shape == (1, btot)

    weights = (w_in, w_ih, w_hh, w_l1, w_l2, w_lo,
               w_hg1_h, w_hg2, w_e1, w_e2, w_d1, w_d2)
    weights = tuple(w.astype(weight_dtype) for w in weights)
    return weights + (bias_row,)


# ----------------------------------------------------------------------------
# Pure-JAX reference (mirrors the PyTorch module op-for-op) for numerics check.
# ----------------------------------------------------------------------------
def _reference_step(x, h_in, eps_e, eps_hg, eps_z, p, *, H, L, G, A,
                    ce_w, rec_w, loss_div):
    hp = jax.lax.Precision.HIGHEST

    def lin(v, wb):
        w, b = wb
        return jnp.dot(v, w, precision=hp) + b

    emb = lin(x, p["embed_fc"])
    mu_e, sig_e = emb[:, :L], jnp.exp(emb[:, L:])
    lat = mu_e + sig_e * eps_e
    lat = jax.nn.relu(lin(lat, p["latent_fc1"]))
    lat = lin(lat, p["latent_fc2"])
    fc2_w = lin(lat, p["fc2_w_nn"]).reshape(-1, H, A)
    fc2_b = lin(lat, p["fc2_b_nn"])
    x1 = jax.nn.relu(lin(x, p["fc1"]))
    w_ih, b_ih, w_hh, b_hh = p["gru"]
    gi = jnp.dot(x1, w_ih, precision=hp) + b_ih
    gh = jnp.dot(h_in, w_hh, precision=hp) + b_hh
    r = jax.nn.sigmoid(gi[:, :H] + gh[:, :H])
    z = jax.nn.sigmoid(gi[:, H:2 * H] + gh[:, H:2 * H])
    n = jnp.tanh(gi[:, 2 * H:] + r * gh[:, 2 * H:])
    h = (1.0 - z) * n + z * h_in
    q = jnp.einsum('bh,bha->ba', h, fc2_w, precision=hp) + fc2_b
    hg = jax.nn.relu(lin(jnp.concatenate([h, x], axis=1), p["hg_fc1"]))
    hg = lin(hg, p["hg_fc2"])
    mu_hg, sig_hg = hg[:, :G], jnp.exp(hg[:, G:])
    hg_s = mu_hg + sig_hg * eps_hg
    enc = jax.nn.relu(lin(hg_s, p["encoder_fc1"]))
    enc = lin(enc, p["encoder_fc2"])
    mu_z, sig_z = enc[:, :L], jnp.exp(enc[:, L:])
    z_s = mu_z + sig_z * eps_z
    dec = jax.nn.relu(lin(z_s, p["decoder_fc1"]))
    dec = lin(dec, p["decoder_fc2"])
    mu_d, sig_d = dec[:, :G], jnp.exp(dec[:, G:])
    ent = 0.5 + 0.5 * jnp.log(2.0 * jnp.pi) + jnp.log(sig_e)
    kl_ez = (jnp.log(sig_z) - jnp.log(sig_e)
             + (sig_e ** 2 + (mu_e - mu_z) ** 2) / (2.0 * sig_z ** 2) - 0.5)
    kl_rec = (jnp.log(sig_d) - jnp.log(sig_hg)
              + (sig_hg ** 2 + (mu_hg - mu_d) ** 2) / (2.0 * sig_d ** 2) - 0.5)
    loss = ce_w * (jnp.sum(ent) + jnp.sum(kl_ez)) + rec_w * jnp.sum(kl_rec)
    loss = jnp.log1p(jnp.exp(loss / loss_div))
    return q, h, loss


# ----------------------------------------------------------------------------
# Demo
# ----------------------------------------------------------------------------
if __name__ == "__main__":
    n_agents, bs_env = 2, 8
    B = n_agents * bs_env               # flattened batch of forward()
    I, H, L, G, A = 16, 32, 4, 8, 6
    T = 6                               # rollout length hoisted into the kernel
    ce_w, rec_w = 0.01, 0.1
    loss_div = float(bs_env * n_agents)

    root = jax.random.PRNGKey(0)
    k_in, k_h, k_e, k_hg, k_z, k_par = jax.random.split(root, 6)
    inputs = jax.random.normal(k_in, (T, B, I), jnp.float32)
    hidden = 0.1 * jax.random.normal(k_h, (B, H), jnp.float32)
    eps_e = jax.random.normal(k_e, (T, B, L), jnp.float32)     # rsample noise, drawn
    eps_hg = jax.random.normal(k_hg, (T, B, G), jnp.float32)   # outside the kernel
    eps_z = jax.random.normal(k_z, (T, B, L), jnp.float32)

    params = make_params(k_par, I, H, L, G, A)
    kparams = prepare_kernel_params(params, I=I, H=H, L=L, G=G, A=A)

    # T-step rollout, single pallas_call; tile_b auto-picks 8 -> grid (2, 6),
    # the batch axis shards across v7x's two TensorCores.
    q_seq, h_seq, h_final, loss_seq = latent_vae_rnn_forward_sequence(
        inputs, hidden, eps_e, eps_hg, eps_z, kparams,
        hidden_dim=H, latent_dim=L, hg_dim=G, n_actions=A,
        ce_loss_weight=ce_w, rec_loss_weight=rec_w, loss_div=loss_div)
    jax.block_until_ready((q_seq, h_seq, h_final, loss_seq))

    assert q_seq.shape == (T, B, A)
    assert h_seq.shape == (T, B, H)
    assert h_final.shape == (B, H)
    assert loss_seq.shape == (T,)

    # Single-step wrapper (module-equivalent signature), same kernel with T=1.
    q1, h1, loss1 = latent_vae_rnn_forward(
        inputs[0], hidden, eps_e[0], eps_hg[0], eps_z[0], kparams,
        hidden_dim=H, latent_dim=L, hg_dim=G, n_actions=A,
        ce_loss_weight=ce_w, rec_loss_weight=rec_w, loss_div=loss_div)
    jax.block_until_ready((q1, h1, loss1))

    # Pure-JAX reference rollout on the unpacked params.
    h_ref = hidden
    q_ref_l, h_ref_l, loss_ref_l = [], [], []
    for step in range(T):
        q_r, h_ref, l_r = _reference_step(
            inputs[step], h_ref, eps_e[step], eps_hg[step], eps_z[step], params,
            H=H, L=L, G=G, A=A, ce_w=ce_w, rec_w=rec_w, loss_div=loss_div)
        q_ref_l.append(q_r)
        h_ref_l.append(h_ref)
        loss_ref_l.append(l_r)
    q_ref = jnp.stack(q_ref_l)
    h_ref_seq = jnp.stack(h_ref_l)
    loss_ref = jnp.stack(loss_ref_l)

    tol = 1e-2
    assert float(jnp.max(jnp.abs(q_seq - q_ref))) < tol
    assert float(jnp.max(jnp.abs(h_seq - h_ref_seq))) < tol
    assert float(jnp.max(jnp.abs(h_final - h_ref_seq[-1]))) < tol
    assert float(jnp.max(jnp.abs(loss_seq - loss_ref))) < tol
    assert float(jnp.max(jnp.abs(q1 - q_seq[0]))) < 1e-4
    assert float(jnp.max(jnp.abs(h1 - h_seq[0]))) < 1e-4
    assert bool(jnp.all(jnp.isfinite(q_seq))) and bool(jnp.all(jnp.isfinite(loss_seq)))

    # TODO(synk): TensorBoard SummaryWriter / add_embedding side effects (episode
    # runner) have no kernel equivalent; Gaussian rsample RNG is provided as inputs.
    print("KERNEL_OK")
</pallas_src>

<mosaic_0001>
module attributes {stable_mosaic.version = 11 : i64} {
  func.func @_latent_vae_rnn_kernel(%arg0: i32, %arg1: i32, %arg2: memref<1x8x16xf32, #tpu.memory_space<vmem>>, %arg3: memref<8x32xf32, #tpu.memory_space<vmem>>, %arg4: memref<1x8x16xf32, #tpu.memory_space<vmem>>, %arg5: memref<16x72xf32, #tpu.memory_space<vmem>>, %arg6: memref<32x96xf32, #tpu.memory_space<vmem>>, %arg7: memref<32x96xf32, #tpu.memory_space<vmem>>, %arg8: memref<4x16xf32, #tpu.memory_space<vmem>>, %arg9: memref<16x16xf32, #tpu.memory_space<vmem>>, %arg10: memref<16x198xf32, #tpu.memory_space<vmem>>, %arg11: memref<32x32xf32, #tpu.memory_space<vmem>>, %arg12: memref<32x16xf32, #tpu.memory_space<vmem>>, %arg13: memref<8x16xf32, #tpu.memory_space<vmem>>, %arg14: memref<16x8xf32, #tpu.memory_space<vmem>>, %arg15: memref<4x8xf32, #tpu.memory_space<vmem>>, %arg16: memref<8x16xf32, #tpu.memory_space<vmem>>, %arg17: memref<1x1536xf32, #tpu.memory_space<vmem>>, %arg18: memref<1x8x39xf32, #tpu.memory_space<vmem>>, %arg19: memref<8x32xf32, #tpu.memory_space<vmem>>) attributes {dimension_semantics = [#tpu.dimension_semantics<parallel>, #tpu.dimension_semantics<arbitrary>], iteration_bounds = array<i64: 2, 6>, scalar_prefetch = 0 : i64, scratch_operands = 0 : i64, tpu.core_type = #tpu.core_type<tc>, window_params = [{transform_indices = @transform_0, window_bounds = array<i64: 1, 8, 16>}, {transform_indices = @transform_1, window_bounds = array<i64: 8, 32>}, {transform_indices = @transform_2, window_bounds = array<i64: 1, 8, 16>}, {pipeline_mode = #tpu.pipeline_mode<synchronous>, transform_indices = @transform_3, window_bounds = array<i64: 16, 72>}, {pipeline_mode = #tpu.pipeline_mode<synchronous>, transform_indices = @transform_4, window_bounds = array<i64: 32, 96>}, {pipeline_mode = #tpu.pipeline_mode<synchronous>, transform_indices = @transform_5, window_bounds = array<i64: 32, 96>}, {pipeline_mode = #tpu.pipeline_mode<synchronous>, transform_indices = @transform_6, window_bounds = array<i64: 4, 16>}, {pipeline_mode = #tpu.pipeline_mode<synchronous>, transform_indices = @transform_7, window_bounds = array<i64: 16, 16>}, {pipeline_mode = #tpu.pipeline_mode<synchronous>, transform_indices = @transform_8, window_bounds = array<i64: 16, 198>}, {pipeline_mode = #tpu.pipeline_mode<synchronous>, transform_indices = @transform_9, window_bounds = array<i64: 32, 32>}, {pipeline_mode = #tpu.pipeline_mode<synchronous>, transform_indices = @transform_10, window_bounds = array<i64: 32, 16>}, {pipeline_mode = #tpu.pipeline_mode<synchronous>, transform_indices = @transform_11, window_bounds = array<i64: 8, 16>}, {pipeline_mode = #tpu.pipeline_mode<synchronous>, transform_indices = @transform_12, window_bounds = array<i64: 16, 8>}, {pipeline_mode = #tpu.pipeline_mode<synchronous>, transform_indices = @transform_13, window_bounds = array<i64: 4, 8>}, {pipeline_mode = #tpu.pipeline_mode<synchronous>, transform_indices = @transform_14, window_bounds = array<i64: 8, 16>}, {pipeline_mode = #tpu.pipeline_mode<synchronous>, transform_indices = @transform_15, window_bounds = array<i64: 1, 1536>}, {transform_indices = @transform_16, window_bounds = array<i64: 1, 8, 39>}, {transform_indices = @transform_17, window_bounds = array<i64: 8, 32>}]} {
    %c0 = arith.constant 0 : index
    %c0_0 = arith.constant 0 : index
    %c0_1 = arith.constant 0 : index
    %0 = vector.load %arg2[%c0, %c0_0, %c0_1] : memref<1x8x16xf32, #tpu.memory_space<vmem>>, vector<1x8x16xf32>
    %1 = vector.shape_cast %0 : vector<1x8x16xf32> to vector<8x16xf32>
    %c0_2 = arith.constant 0 : index
    %c0_3 = arith.constant 0 : index
    %c0_4 = arith.constant 0 : index
    %2 = vector.load %arg4[%c0_2, %c0_3, %c0_4] : memref<1x8x16xf32, #tpu.memory_space<vmem>>, vector<1x8x16xf32>
    %3 = vector.shape_cast %2 : vector<1x8x16xf32> to vector<8x16xf32>
    %c0_i32 = arith.constant 0 : i32
    %4 = arith.cmpi eq, %arg1, %c0_i32 : i32
    %5 = arith.extui %4 : i1 to i32
    %c0_i32_5 = arith.constant 0 : i32
    %6 = arith.cmpi ne, %5, %c0_i32_5 : i32
    scf.if %6 {
      %c0_84 = arith.constant 0 : index
      %c0_85 = arith.constant 0 : index
      %192 = vector.load %arg3[%c0_84, %c0_85] : memref<8x32xf32, #tpu.memory_space<vmem>>, vector<8x32xf32>
      %c0_86 = arith.constant 0 : index
      %c0_87 = arith.constant 0 : index
      %193 = vector.load %arg19[%c0_86, %c0_87] : memref<8x32xf32, #tpu.memory_space<vmem>>, vector<8x32xf32>
      tpu.vector_store %arg19[%c0_86, %c0_87], %192 {strides = array<i32>} : memref<8x32xf32, #tpu.memory_space<vmem>>, vector<8x32xf32>,
    } else {
    }
    %c0_6 = arith.constant 0 : index
    %c0_7 = arith.constant 0 : index
    %7 = vector.load %arg19[%c0_6, %c0_7] : memref<8x32xf32, #tpu.memory_space<vmem>>, vector<8x32xf32>
    %c0_8 = arith.constant 0 : index
    %c0_9 = arith.constant 0 : index
    %8 = vector.load %arg5[%c0_8, %c0_9] : memref<16x72xf32, #tpu.memory_space<vmem>>, vector<16x72xf32>
    %cst = arith.constant dense<0.000000e+00> : vector<8x72xf32>
    %9 = tpu.matmul %1, %8, %cst {dimension_numbers = #tpu.dot_dimension_numbers<[1], [0], [0], [1], [0, 0, 1, 1], [], []>} : vector<8x16xf32>, vector<16x72xf32>, vector<8x72xf32> -> vector<8x72xf32>
    %c0_10 = arith.constant 0 : index
    %c0_11 = arith.constant 0 : index
    %10 = vector.load %arg17[%c0_10, %c0_11] : memref<1x1536xf32, #tpu.memory_space<vmem>>, vector<1x72xf32>
    %11 = vector.broadcast %10 : vector<1x72xf32> to vector<8x72xf32>
    %12 = arith.addf %9, %11 : vector<8x72xf32>
    %13 = vector.extract_strided_slice %12 {offsets = [0, 0], sizes = [8, 4], strides = [1, 1]} : vector<8x72xf32> to vector<8x4xf32>
    %14 = vector.extract_strided_slice %12 {offsets = [0, 4], sizes = [8, 4], strides = [1, 1]} : vector<8x72xf32> to vector<8x4xf32>
    %15 = vector.extract_strided_slice %12 {offsets = [0, 8], sizes = [8, 32], strides = [1, 1]} : vector<8x72xf32> to vector<8x32xf32>
    %cst_12 = arith.constant 0.000000e+00 : f32
    %16 = vector.broadcast %cst_12 : f32 to vector<8x32xf32>
    %17 = arith.maximumf %15, %16 : vector<8x32xf32>
    %18 = vector.extract_strided_slice %12 {offsets = [0, 40], sizes = [8, 32], strides = [1, 1]} : vector<8x72xf32> to vector<8x32xf32>
    %19 = math.exp %14 : vector<8x4xf32>
    %20 = vector.extract_strided_slice %3 {offsets = [0, 0], sizes = [8, 4], strides = [1, 1]} : vector<8x16xf32> to vector<8x4xf32>
    %21 = arith.mulf %19, %20 : vector<8x4xf32>
    %22 = arith.addf %13, %21 : vector<8x4xf32>
    %c0_13 = arith.constant 0 : index
    %c0_14 = arith.constant 0 : index
    %23 = vector.load %arg8[%c0_13, %c0_14] : memref<4x16xf32, #tpu.memory_space<vmem>>, vector<4x16xf32>
    %cst_15 = arith.constant dense<0.000000e+00> : vector<8x16xf32>
    %24 = tpu.matmul %22, %23, %cst_15 {dimension_numbers = #tpu.dot_dimension_numbers<[1], [0], [0], [1], [0, 0, 1, 1], [], []>} : vector<8x4xf32>, vector<4x16xf32>, vector<8x16xf32> -> vector<8x16xf32>
    %c0_16 = arith.constant 0 : index
    %c384 = arith.constant 384 : index
    %25 = vector.load %arg17[%c0_16, %c384] : memref<1x1536xf32, #tpu.memory_space<vmem>>, vector<1x16xf32>
    %26 = vector.broadcast %25 : vector<1x16xf32> to vector<8x16xf32>
    %27 = arith.addf %24, %26 : vector<8x16xf32>
    %cst_17 = arith.constant 0.000000e+00 : f32
    %28 = vector.broadcast %cst_17 : f32 to vector<8x16xf32>
    %29 = arith.maximumf %27, %28 : vector<8x16xf32>
    %c0_18 = arith.constant 0 : index
    %c0_19 = arith.constant 0 : index
    %30 = vector.load %arg9[%c0_18, %c0_19] : memref<16x16xf32, #tpu.memory_space<vmem>>, vector<16x16xf32>
    %cst_20 = arith.constant dense<0.000000e+00> : vector<8x16xf32>
    %31 = tpu.matmul %29, %30, %cst_20 {dimension_numbers = #tpu.dot_dimension_numbers<[1], [0], [0], [1], [0, 0, 1, 1], [], []>} : vector<8x16xf32>, vector<16x16xf32>, vector<8x16xf32> -> vector<8x16xf32>
    %c0_21 = arith.constant 0 : index
    %c512 = arith.constant 512 : index
    %32 = vector.load %arg17[%c0_21, %c512] : memref<1x1536xf32, #tpu.memory_space<vmem>>, vector<1x16xf32>
    %33 = vector.broadcast %32 : vector<1x16xf32> to vector<8x16xf32>
    %34 = arith.addf %31, %33 : vector<8x16xf32>
    %c0_22 = arith.constant 0 : index
    %c0_23 = arith.constant 0 : index
    %35 = vector.load %arg10[%c0_22, %c0_23] : memref<16x198xf32, #tpu.memory_space<vmem>>, vector<16x198xf32>
    %cst_24 = arith.constant dense<0.000000e+00> : vector<8x198xf32>
    %36 = tpu.matmul %34, %35, %cst_24 {dimension_numbers = #tpu.dot_dimension_numbers<[1], [0], [0], [1], [0, 0, 1, 1], [], []>} : vector<8x16xf32>, vector<16x198xf32>, vector<8x198xf32> -> vector<8x198xf32>
    %c0_25 = arith.constant 0 : index
    %c640 = arith.constant 640 : index
    %37 = vector.load %arg17[%c0_25, %c640] : memref<1x1536xf32, #tpu.memory_space<vmem>>, vector<1x198xf32>
    %38 = vector.broadcast %37 : vector<1x198xf32> to vector<8x198xf32>
    %39 = arith.addf %36, %38 : vector<8x198xf32>
    %c0_26 = arith.constant 0 : index
    %c0_27 = arith.constant 0 : index
    %40 = vector.load %arg6[%c0_26, %c0_27] : memref<32x96xf32, #tpu.memory_space<vmem>>, vector<32x96xf32>
    %cst_28 = arith.constant dense<0.000000e+00> : vector<8x96xf32>
    %41 = tpu.matmul %17, %40, %cst_28 {dimension_numbers = #tpu.dot_dimension_numbers<[1], [0], [0], [1], [0, 0, 1, 1], [], []>} : vector<8x32xf32>, vector<32x96xf32>, vector<8x96xf32> -> vector<8x96xf32>
    %c0_29 = arith.constant 0 : index
    %c128 = arith.constant 128 : index
    %42 = vector.load %arg17[%c0_29, %c128] : memref<1x1536xf32, #tpu.memory_space<vmem>>, vector<1x96xf32>
    %43 = vector.broadcast %42 : vector<1x96xf32> to vector<8x96xf32>
    %44 = arith.addf %41, %43 : vector<8x96xf32>
    %c0_30 = arith.constant 0 : index
    %c0_31 = arith.constant 0 : index
    %45 = vector.load %arg7[%c0_30, %c0_31] : memref<32x96xf32, #tpu.memory_space<vmem>>, vector<32x96xf32>
    %cst_32 = arith.constant dense<0.000000e+00> : vector<8x96xf32>
    %46 = tpu.matmul %7, %45, %cst_32 {dimension_numbers = #tpu.dot_dimension_numbers<[1], [0], [0], [1], [0, 0, 1, 1], [], []>} : vector<8x32xf32>, vector<32x96xf32>, vector<8x96xf32> -> vector<8x96xf32>
    %c0_33 = arith.constant 0 : index
    %c256 = arith.constant 256 : index
    %47 = vector.load %arg17[%c0_33, %c256] : memref<1x1536xf32, #tpu.memory_space<vmem>>, vector<1x96xf32>
    %48 = vector.broadcast %47 : vector<1x96xf32> to vector<8x96xf32>
    %49 = arith.addf %46, %48 : vector<8x96xf32>
    %50 = vector.extract_strided_slice %44 {offsets = [0, 0], sizes = [8, 32], strides = [1, 1]} : vector<8x96xf32> to vector<8x32xf32>
    %51 = vector.extract_strided_slice %49 {offsets = [0, 0], sizes = [8, 32], strides = [1, 1]} : vector<8x96xf32> to vector<8x32xf32>
    %52 = arith.addf %50, %51 : vector<8x32xf32>
    %53 = arith.negf %52 : vector<8x32xf32>
    %54 = math.exp %53 : vector<8x32xf32>
    %cst_34 = arith.constant 1.000000e+00 : f32
    %55 = vector.broadcast %cst_34 : f32 to vector<8x32xf32>
    %56 = arith.addf %55, %54 : vector<8x32xf32>
    %57 = arith.divf %55, %56 : vector<8x32xf32>
    %58 = vector.extract_strided_slice %44 {offsets = [0, 32], sizes = [8, 32], strides = [1, 1]} : vector<8x96xf32> to vector<8x32xf32>
    %59 = vector.extract_strided_slice %49 {offsets = [0, 32], sizes = [8, 32], strides = [1, 1]} : vector<8x96xf32> to vector<8x32xf32>
    %60 = arith.addf %58, %59 : vector<8x32xf32>
    %61 = arith.negf %60 : vector<8x32xf32>
    %62 = math.exp %61 : vector<8x32xf32>
    %cst_35 = arith.constant 1.000000e+00 : f32
    %63 = vector.broadcast %cst_35 : f32 to vector<8x32xf32>
    %64 = arith.addf %63, %62 : vector<8x32xf32>
    %65 = arith.divf %63, %64 : vector<8x32xf32>
    %66 = vector.extract_strided_slice %44 {offsets = [0, 64], sizes = [8, 32], strides = [1, 1]} : vector<8x96xf32> to vector<8x32xf32>
    %67 = vector.extract_strided_slice %49 {offsets = [0, 64], sizes = [8, 32], strides = [1, 1]} : vector<8x96xf32> to vector<8x32xf32>
    %68 = arith.mulf %57, %67 : vector<8x32xf32>
    %69 = arith.addf %66, %68 : vector<8x32xf32>
    %70 = math.tanh %69 : vector<8x32xf32>
    %cst_36 = arith.constant 1.000000e+00 : f32
    %71 = vector.broadcast %cst_36 : f32 to vector<8x32xf32>
    %72 = arith.subf %71, %65 : vector<8x32xf32>
    %73 = arith.mulf %72, %70 : vector<8x32xf32>
    %74 = arith.mulf %65, %7 : vector<8x32xf32>
    %75 = arith.addf %73, %74 : vector<8x32xf32>
    %c0_37 = arith.constant 0 : index
    %c0_38 = arith.constant 0 : index
    %76 = vector.load %arg19[%c0_37, %c0_38] : memref<8x32xf32, #tpu.memory_space<vmem>>, vector<8x32xf32>
    tpu.vector_store %arg19[%c0_37, %c0_38], %75 {strides = array<i32>} : memref<8x32xf32, #tpu.memory_space<vmem>>, vector<8x32xf32>,
    %77 = vector.extract_strided_slice %39 {offsets = [0, 0], sizes = [8, 32], strides = [1, 1]} : vector<8x198xf32> to vector<8x32xf32>
    %78 = arith.mulf %75, %77 : vector<8x32xf32>
    %cst_39 = arith.constant dense<0.000000e+00> : vector<8xf32>
    %79 = vector.multi_reduction <add>, %78, %cst_39 [1] : vector<8x32xf32> to vector<8xf32>
    %80 = vector.shape_cast %79 : vector<8xf32> to vector<8x1xf32>
    %81 = vector.extract_strided_slice %39 {offsets = [0, 32], sizes = [8, 32], strides = [1, 1]} : vector<8x198xf32> to vector<8x32xf32>
    %82 = arith.mulf %75, %81 : vector<8x32xf32>
    %cst_40 = arith.constant dense<0.000000e+00> : vector<8xf32>
    %83 = vector.multi_reduction <add>, %82, %cst_40 [1] : vector<8x32xf32> to vector<8xf32>
    %84 = vector.shape_cast %83 : vector<8xf32> to vector<8x1xf32>
    %85 = vector.extract_strided_slice %39 {offsets = [0, 64], sizes = [8, 32], strides = [1, 1]} : vector<8x198xf32> to vector<8x32xf32>
    %86 = arith.mulf %75, %85 : vector<8x32xf32>
    %cst_41 = arith.constant dense<0.000000e+00> : vector<8xf32>
    %87 = vector.multi_reduction <add>, %86, %cst_41 [1] : vector<8x32xf32> to vector<8xf32>
    %88 = vector.shape_cast %87 : vector<8xf32> to vector<8x1xf32>
    %89 = vector.extract_strided_slice %39 {offsets = [0, 96], sizes = [8, 32], strides = [1, 1]} : vector<8x198xf32> to vector<8x32xf32>
    %90 = arith.mulf %75, %89 : vector<8x32xf32>
    %cst_42 = arith.constant dense<0.000000e+00> : vector<8xf32>
    %91 = vector.multi_reduction <add>, %90, %cst_42 [1] : vector<8x32xf32> to vector<8xf32>
    %92 = vector.shape_cast %91 : vector<8xf32> to vector<8x1xf32>
    %93 = vector.extract_strided_slice %39 {offsets = [0, 128], sizes = [8, 32], strides = [1, 1]} : vector<8x198xf32> to vector<8x32xf32>
    %94 = arith.mulf %75, %93 : vector<8x32xf32>
    %cst_43 = arith.constant dense<0.000000e+00> : vector<8xf32>
    %95 = vector.multi_reduction <add>, %94, %cst_43 [1] : vector<8x32xf32> to vector<8xf32>
    %96 = vector.shape_cast %95 : vector<8xf32> to vector<8x1xf32>
    %97 = vector.extract_strided_slice %39 {offsets = [0, 160], sizes = [8, 32], strides = [1, 1]} : vector<8x198xf32> to vector<8x32xf32>
    %98 = arith.mulf %75, %97 : vector<8x32xf32>
    %cst_44 = arith.constant dense<0.000000e+00> : vector<8xf32>
    %99 = vector.multi_reduction <add>, %98, %cst_44 [1] : vector<8x32xf32> to vector<8xf32>
    %100 = vector.shape_cast %99 : vector<8xf32> to vector<8x1xf32>
    %101 = tpu.concatenate %80, %84, %88, %92, %96, %100 in 1 : vector<8x1xf32>, vector<8x1xf32>, vector<8x1xf32>, vector<8x1xf32>, vector<8x1xf32>, vector<8x1xf32> -> vector<8x6xf32>
    %102 = vector.extract_strided_slice %39 {offsets = [0, 192], sizes = [8, 6], strides = [1, 1]} : vector<8x198xf32> to vector<8x6xf32>
    %103 = arith.addf %101, %102 : vector<8x6xf32>
    %c0_45 = arith.constant 0 : index
    %c0_46 = arith.constant 0 : index
    %104 = vector.load %arg11[%c0_45, %c0_46] : memref<32x32xf32, #tpu.memory_space<vmem>>, vector<32x32xf32>
    %cst_47 = arith.constant dense<0.000000e+00> : vector<8x32xf32>
    %105 = tpu.matmul %75, %104, %cst_47 {dimension_numbers = #tpu.dot_dimension_numbers<[1], [0], [0], [1], [0, 0, 1, 1], [], []>} : vector<8x32xf32>, vector<32x32xf32>, vector<8x32xf32> -> vector<8x32xf32>
    %106 = arith.addf %105, %18 : vector<8x32xf32>
    %cst_48 = arith.constant 0.000000e+00 : f32
    %107 = vector.broadcast %cst_48 : f32 to vector<8x32xf32>
    %108 = arith.maximumf %106, %107 : vector<8x32xf32>
    %c0_49 = arith.constant 0 : index
    %c0_50 = arith.constant 0 : index
    %109 = vector.load %arg12[%c0_49, %c0_50] : memref<32x16xf32, #tpu.memory_space<vmem>>, vector<32x16xf32>
    %cst_51 = arith.constant dense<0.000000e+00> : vector<8x16xf32>
    %110 = tpu.matmul %108, %109, %cst_51 {dimension_numbers = #tpu.dot_dimension_numbers<[1], [0], [0], [1], [0, 0, 1, 1], [], []>} : vector<8x32xf32>, vector<32x16xf32>, vector<8x16xf32> -> vector<8x16xf32>
    %c0_52 = arith.constant 0 : index
    %c896 = arith.constant 896 : index
    %111 = vector.load %arg17[%c0_52, %c896] : memref<1x1536xf32, #tpu.memory_space<vmem>>, vector<1x16xf32>
    %112 = vector.broadcast %111 : vector<1x16xf32> to vector<8x16xf32>
    %113 = arith.addf %110, %112 : vector<8x16xf32>
    %114 = vector.extract_strided_slice %113 {offsets = [0, 0], sizes = [8, 8], strides = [1, 1]} : vector<8x16xf32> to vector<8x8xf32>
    %115 = vector.extract_strided_slice %113 {offsets = [0, 8], sizes = [8, 8], strides = [1, 1]} : vector<8x16xf32> to vector<8x8xf32>
    %116 = math.exp %115 : vector<8x8xf32>
    %117 = vector.extract_strided_slice %3 {offsets = [0, 4], sizes = [8, 8], strides = [1, 1]} : vector<8x16xf32> to vector<8x8xf32>
    %118 = arith.mulf %116, %117 : vector<8x8xf32>
    %119 = arith.addf %114, %118 : vector<8x8xf32>
    %c0_53 = arith.constant 0 : index
    %c0_54 = arith.constant 0 : index
    %120 = vector.load %arg13[%c0_53, %c0_54] : memref<8x16xf32, #tpu.memory_space<vmem>>, vector<8x16xf32>
    %cst_55 = arith.constant dense<0.000000e+00> : vector<8x16xf32>
    %121 = tpu.matmul %119, %120, %cst_55 {dimension_numbers = #tpu.dot_dimension_numbers<[1], [0], [0], [1], [0, 0, 1, 1], [], []>} : vector<8x8xf32>, vector<8x16xf32>, vector<8x16xf32> -> vector<8x16xf32>
    %c0_56 = arith.constant 0 : index
    %c1024 = arith.constant 1024 : index
    %122 = vector.load %arg17[%c0_56, %c1024] : memref<1x1536xf32, #tpu.memory_space<vmem>>, vector<1x16xf32>
    %123 = vector.broadcast %122 : vector<1x16xf32> to vector<8x16xf32>
    %124 = arith.addf %121, %123 : vector<8x16xf32>
    %cst_57 = arith.constant 0.000000e+00 : f32
    %125 = vector.broadcast %cst_57 : f32 to vector<8x16xf32>
    %126 = arith.maximumf %124, %125 : vector<8x16xf32>
    %c0_58 = arith.constant 0 : index
    %c0_59 = arith.constant 0 : index
    %127 = vector.load %arg14[%c0_58, %c0_59] : memref<16x8xf32, #tpu.memory_space<vmem>>, vector<16x8xf32>
    %cst_60 = arith.constant dense<0.000000e+00> : vector<8x8xf32>
    %128 = tpu.matmul %126, %127, %cst_60 {dimension_numbers = #tpu.dot_dimension_numbers<[1], [0], [0], [1], [0, 0, 1, 1], [], []>} : vector<8x16xf32>, vector<16x8xf32>, vector<8x8xf32> -> vector<8x8xf32>
    %c0_61 = arith.constant 0 : index
    %c1152 = arith.constant 1152 : index
    %129 = vector.load %arg17[%c0_61, %c1152] : memref<1x1536xf32, #tpu.memory_space<vmem>>, vector<1x8xf32>
    %130 = vector.broadcast %129 : vector<1x8xf32> to vector<8x8xf32>
    %131 = arith.addf %128, %130 : vector<8x8xf32>
    %132 = vector.extract_strided_slice %131 {offsets = [0, 0], sizes = [8, 4], strides = [1, 1]} : vector<8x8xf32> to vector<8x4xf32>
    %133 = vector.extract_strided_slice %131 {offsets = [0, 4], sizes = [8, 4], strides = [1, 1]} : vector<8x8xf32> to vector<8x4xf32>
    %134 = math.exp %133 : vector<8x4xf32>
    %135 = vector.extract_strided_slice %3 {offsets = [0, 12], sizes = [8, 4], strides = [1, 1]} : vector<8x16xf32> to vector<8x4xf32>
    %136 = arith.mulf %134, %135 : vector<8x4xf32>
    %137 = arith.addf %132, %136 : vector<8x4xf32>
    %c0_62 = arith.constant 0 : index
    %c0_63 = arith.constant 0 : index
    %138 = vector.load %arg15[%c0_62, %c0_63] : memref<4x8xf32, #tpu.memory_space<vmem>>, vector<4x8xf32>
    %cst_64 = arith.constant dense<0.000000e+00> : vector<8x8xf32>
    %139 = tpu.matmul %137, %138, %cst_64 {dimension_numbers = #tpu.dot_dimension_numbers<[1], [0], [0], [1], [0, 0, 1, 1], [], []>} : vector<8x4xf32>, vector<4x8xf32>, vector<8x8xf32> -> vector<8x8xf32>
    %c0_65 = arith.constant 0 : index
    %c1280 = arith.constant 1280 : index
    %140 = vector.load %arg17[%c0_65, %c1280] : memref<1x1536xf32, #tpu.memory_space<vmem>>, vector<1x8xf32>
    %141 = vector.broadcast %140 : vector<1x8xf32> to vector<8x8xf32>
    %142 = arith.addf %139, %141 : vector<8x8xf32>
    %cst_66 = arith.constant 0.000000e+00 : f32
    %143 = vector.broadcast %cst_66 : f32 to vector<8x8xf32>
    %144 = arith.maximumf %142, %143 : vector<8x8xf32>
    %c0_67 = arith.constant 0 : index
    %c0_68 = arith.constant 0 : index
    %145 = vector.load %arg16[%c0_67, %c0_68] : memref<8x16xf32, #tpu.memory_space<vmem>>, vector<8x16xf32>
    %cst_69 = arith.constant dense<0.000000e+00> : vector<8x16xf32>
    %146 = tpu.matmul %144, %145, %cst_69 {dimension_numbers = #tpu.dot_dimension_numbers<[1], [0], [0], [1], [0, 0, 1, 1], [], []>} : vector<8x8xf32>, vector<8x16xf32>, vector<8x16xf32> -> vector<8x16xf32>
    %c0_70 = arith.constant 0 : index
    %c1408 = arith.constant 1408 : index
    %147 = vector.load %arg17[%c0_70, %c1408] : memref<1x1536xf32, #tpu.memory_space<vmem>>, vector<1x16xf32>
    %148 = vector.broadcast %147 : vector<1x16xf32> to vector<8x16xf32>
    %149 = arith.addf %146, %148 : vector<8x16xf32>
    %150 = vector.extract_strided_slice %149 {offsets = [0, 0], sizes = [8, 8], strides = [1, 1]} : vector<8x16xf32> to vector<8x8xf32>
    %151 = vector.extract_strided_slice %149 {offsets = [0, 8], sizes = [8, 8], strides = [1, 1]} : vector<8x16xf32> to vector<8x8xf32>
    %cst_71 = arith.constant 0.918938517 : f32
    %152 = vector.broadcast %cst_71 : f32 to vector<8x4xf32>
    %153 = arith.addf %152, %133 : vector<8x4xf32>
    %154 = arith.mulf %19, %19 : vector<8x4xf32>
    %155 = arith.subf %13, %132 : vector<8x4xf32>
    %156 = arith.mulf %155, %155 : vector<8x4xf32>
    %157 = arith.addf %154, %156 : vector<8x4xf32>
    %cst_72 = arith.constant 5.000000e-01 : f32
    %158 = vector.broadcast %cst_72 : f32 to vector<8x4xf32>
    %159 = arith.mulf %158, %157 : vector<8x4xf32>
    %cst_73 = arith.constant -2.000000e+00 : f32
    %160 = vector.broadcast %cst_73 : f32 to vector<8x4xf32>
    %161 = arith.mulf %160, %133 : vector<8x4xf32>
    %162 = math.exp %161 : vector<8x4xf32>
    %163 = arith.mulf %159, %162 : vector<8x4xf32>
    %164 = arith.addf %153, %163 : vector<8x4xf32>
    %165 = arith.subf %151, %115 : vector<8x8xf32>
    %166 = arith.mulf %116, %116 : vector<8x8xf32>
    %167 = arith.subf %114, %150 : vector<8x8xf32>
    %168 = arith.mulf %167, %167 : vector<8x8xf32>
    %169 = arith.addf %166, %168 : vector<8x8xf32>
    %cst_74 = arith.constant 5.000000e-01 : f32
    %170 = vector.broadcast %cst_74 : f32 to vector<8x8xf32>
    %171 = arith.mulf %170, %169 : vector<8x8xf32>
    %cst_75 = arith.constant -2.000000e+00 : f32
    %172 = vector.broadcast %cst_75 : f32 to vector<8x8xf32>
    %173 = arith.mulf %172, %151 : vector<8x8xf32>
    %174 = math.exp %173 : vector<8x8xf32>
    %175 = arith.mulf %171, %174 : vector<8x8xf32>
    %176 = arith.addf %165, %175 : vector<8x8xf32>
    %cst_76 = arith.constant 5.000000e-01 : f32
    %177 = vector.broadcast %cst_76 : f32 to vector<8x8xf32>
    %178 = arith.subf %176, %177 : vector<8x8xf32>
    %cst_77 = arith.constant dense<0.000000e+00> : vector<8xf32>
    %179 = vector.multi_reduction <add>, %164, %cst_77 [1] : vector<8x4xf32> to vector<8xf32>
    %180 = vector.shape_cast %179 : vector<8xf32> to vector<8x1xf32>
    %cst_78 = arith.constant 0.00999999977 : f32
    %181 = vector.broadcast %cst_78 : f32 to vector<8x1xf32>
    %182 = arith.mulf %181, %180 : vector<8x1xf32>
    %cst_79 = arith.constant dense<0.000000e+00> : vector<8xf32>
    %183 = vector.multi_reduction <add>, %178, %cst_79 [1] : vector<8x8xf32> to vector<8xf32>
    %184 = vector.shape_cast %183 : vector<8xf32> to vector<8x1xf32>
    %cst_80 = arith.constant 1.000000e-01 : f32
    %185 = vector.broadcast %cst_80 : f32 to vector<8x1xf32>
    %186 = arith.mulf %185, %184 : vector<8x1xf32>
    %187 = arith.addf %182, %186 : vector<8x1xf32>
    %188 = tpu.concatenate %103, %75, %187 in 1 : vector<8x6xf32>, vector<8x32xf32>, vector<8x1xf32> -> vector<8x39xf32>
    %c0_81 = arith.constant 0 : index
    %c0_82 = arith.constant 0 : index
    %c0_83 = arith.constant 0 : index
    %189 = vector.load %arg18[%c0_81, %c0_82, %c0_83] : memref<1x8x39xf32, #tpu.memory_space<vmem>>, vector<1x8x39xf32>
    %190 = vector.shape_cast %189 : vector<1x8x39xf32> to vector<8x39xf32>
    %191 = vector.shape_cast %188 : vector<8x39xf32> to vector<1x8x39xf32>
    tpu.vector_store %arg18[%c0_81, %c0_82, %c0_83], %191 {strides = array<i32>} : memref<1x8x39xf32, #tpu.memory_space<vmem>>, vector<1x8x39xf32>,
    return
  }
  func.func @transform_0(%arg0: i32, %arg1: i32) -> (i32, i32, i32) {
    %c0_i32 = arith.constant 0 : i32
    %c0_i32_0 = arith.constant 0 : i32
    return %arg1, %arg0, %c0_i32 : i32, i32, i32
  }
  func.func @transform_1(%arg0: i32, %arg1: i32) -> (i32, i32) {
    %c0_i32 = arith.constant 0 : i32
    %c0_i32_0 = arith.constant 0 : i32
    return %arg0, %c0_i32 : i32, i32
  }
  func.func @transform_2(%arg0: i32, %arg1: i32) -> (i32, i32, i32) {
    %c0_i32 = arith.constant 0 : i32
    %c0_i32_0 = arith.constant 0 : i32
    return %arg1, %arg0, %c0_i32 : i32, i32, i32
  }
  func.func @transform_3(%arg0: i32, %arg1: i32) -> (i32, i32) {
    %c0_i32 = arith.constant 0 : i32
    %c0_i32_0 = arith.constant 0 : i32
    %c0_i32_1 = arith.constant 0 : i32
    return %c0_i32, %c0_i32_0 : i32, i32
  }
  func.func @transform_4(%arg0: i32, %arg1: i32) -> (i32, i32) {
    %c0_i32 = arith.constant 0 : i32
    %c0_i32_0 = arith.constant 0 : i32
    %c0_i32_1 = arith.constant 0 : i32
    return %c0_i32, %c0_i32_0 : i32, i32
  }
  func.func @transform_5(%arg0: i32, %arg1: i32) -> (i32, i32) {
    %c0_i32 = arith.constant 0 : i32
    %c0_i32_0 = arith.constant 0 : i32
    %c0_i32_1 = arith.constant 0 : i32
    return %c0_i32, %c0_i32_0 : i32, i32
  }
  func.func @transform_6(%arg0: i32, %arg1: i32) -> (i32, i32) {
    %c0_i32 = arith.constant 0 : i32
    %c0_i32_0 = arith.constant 0 : i32
    %c0_i32_1 = arith.constant 0 : i32
    return %c0_i32, %c0_i32_0 : i32, i32
  }
  func.func @transform_7(%arg0: i32, %arg1: i32) -> (i32, i32) {
    %c0_i32 = arith.constant 0 : i32
    %c0_i32_0 = arith.constant 0 : i32
    %c0_i32_1 = arith.constant 0 : i32
    return %c0_i32, %c0_i32_0 : i32, i32
  }
  func.func @transform_8(%arg0: i32, %arg1: i32) -> (i32, i32) {
    %c0_i32 = arith.constant 0 : i32
    %c0_i32_0 = arith.constant 0 : i32
    %c0_i32_1 = arith.constant 0 : i32
    return %c0_i32, %c0_i32_0 : i32, i32
  }
  func.func @transform_9(%arg0: i32, %arg1: i32) -> (i32, i32) {
    %c0_i32 = arith.constant 0 : i32
    %c0_i32_0 = arith.constant 0 : i32
    %c0_i32_1 = arith.constant 0 : i32
    return %c0_i32, %c0_i32_0 : i32, i32
  }
  func.func @transform_10(%arg0: i32, %arg1: i32) -> (i32, i32) {
    %c0_i32 = arith.constant 0 : i32
    %c0_i32_0 = arith.constant 0 : i32
    %c0_i32_1 = arith.constant 0 : i32
    return %c0_i32, %c0_i32_0 : i32, i32
  }
  func.func @transform_11(%arg0: i32, %arg1: i32) -> (i32, i32) {
    %c0_i32 = arith.constant 0 : i32
    %c0_i32_0 = arith.constant 0 : i32
    %c0_i32_1 = arith.constant 0 : i32
    return %c0_i32, %c0_i32_0 : i32, i32
  }
  func.func @transform_12(%arg0: i32, %arg1: i32) -> (i32, i32) {
    %c0_i32 = arith.constant 0 : i32
    %c0_i32_0 = arith.constant 0 : i32
    %c0_i32_1 = arith.constant 0 : i32
    return %c0_i32, %c0_i32_0 : i32, i32
  }
  func.func @transform_13(%arg0: i32, %arg1: i32) -> (i32, i32) {
    %c0_i32 = arith.constant 0 : i32
    %c0_i32_0 = arith.constant 0 : i32
    %c0_i32_1 = arith.constant 0 : i32
    return %c0_i32, %c0_i32_0 : i32, i32
  }
  func.func @transform_14(%arg0: i32, %arg1: i32) -> (i32, i32) {
    %c0_i32 = arith.constant 0 : i32
    %c0_i32_0 = arith.constant 0 : i32
    %c0_i32_1 = arith.constant 0 : i32
    return %c0_i32, %c0_i32_0 : i32, i32
  }
  func.func @transform_15(%arg0: i32, %arg1: i32) -> (i32, i32) {
    %c0_i32 = arith.constant 0 : i32
    %c0_i32_0 = arith.constant 0 : i32
    %c0_i32_1 = arith.constant 0 : i32
    return %c0_i32, %c0_i32_0 : i32, i32
  }
  func.func @transform_16(%arg0: i32, %arg1: i32) -> (i32, i32, i32) {
    %c0_i32 = arith.constant 0 : i32
    %c0_i32_0 = arith.constant 0 : i32
    return %arg1, %arg0, %c0_i32 : i32, i32, i32
  }
  func.func @transform_17(%arg0: i32, %arg1: i32) -> (i32, i32) {
    %c0_i32 = arith.constant 0 : i32
    %c0_i32_0 = arith.constant 0 : i32
    return %arg0, %c0_i32 : i32, i32
  }
}

</mosaic_0001>

<llo_original>
// kernel: tpu_custom_call.1
$region0: #{tpu_custom_call.1}
  #allocation0 [shape = 'u32[]', space=smem, size = 0x4, offset = 0x4, fixed_abs, tag = 'smem constant byte address 0x4 - core index']
  #allocation1 [shape = 'u32[144,128]{1,0:T(1,128)}', space=vmem, size = 0x12000, scoped, tag = 'internal scratch']
  %s0 = inlined_call_operand.hbm [shape: f32[6,16,16], index: 0, kind: input, shape index: {}]
  %s1 = inlined_call_operand.hbm [shape: f32[16,32], index: 1, kind: input, shape index: {}]
  %s2 = inlined_call_operand.hbm [shape: f32[6,16,16], index: 2, kind: input, shape index: {}]
  %s3 = inlined_call_operand.hbm [shape: f32[16,72], index: 3, kind: input, shape index: {}]
  %s4 = inlined_call_operand.vmem [shape: f32[32,96], index: 4, kind: input, shape index: {}]
  %s5 = inlined_call_operand.vmem [shape: f32[32,96], index: 5, kind: input, shape index: {}]
  %s6 = inlined_call_operand.hbm [shape: f32[4,16], index: 6, kind: input, shape index: {}]
  %s7 = inlined_call_operand.hbm [shape: f32[16,16], index: 7, kind: input, shape index: {}]
  %s8 = inlined_call_operand.hbm [shape: f32[16,198], index: 8, kind: input, shape index: {}]
  %s9 = inlined_call_operand.hbm [shape: f32[32,32], index: 9, kind: input, shape index: {}]
  %s10 = inlined_call_operand.vmem [shape: f32[32,16], index: 10, kind: input, shape index: {}]
  %s11 = inlined_call_operand.hbm [shape: f32[8,16], index: 11, kind: input, shape index: {}]
  %s12 = inlined_call_operand.vmem [shape: f32[16,8], index: 12, kind: input, shape index: {}]
  %s13 = inlined_call_operand.hbm [shape: f32[4,8], index: 13, kind: input, shape index: {}]
  %s14 = inlined_call_operand.hbm [shape: f32[8,16], index: 14, kind: input, shape index: {}]
  %s15 = inlined_call_operand.vmem [shape: f32[1,1536], index: 15, kind: input, shape index: {}]
  %s16 = inlined_call_operand.hbm [shape: f32[6,16,39], index: 16, kind: output, shape index: {0}]
  %s17 = inlined_call_operand.hbm [shape: f32[16,32], index: 17, kind: output, shape index: {1}]
  %18 = xla_tuple %s16, %s17
  %s19 = sld [smem:[#allocation0]]
  $region153: #{tpu_custom_call.1} parent=0
    _
  %s21 = ssub.s32 1, %s19
  %s22 = scalar_select 0, %s21, %s19
  $region1: #{tpu_custom_call.1} parent=0
    #allocation2 [shape = 'u8[8192]{0}', space=vmem, size = 0x2000, scoped, tag = 'input window, operand 0']
    #allocation3 [shape = 's32[2]{0}', space=sflag, size = 0x8, scoped, tag = 'scoped memory for tpu_custom_call.1']
    #allocation4 [shape = 's32[2]{0}', space=sflag, size = 0x8, scoped, tag = 'scoped memory for tpu_custom_call.1']
    #allocation5 [shape = 'u8[8192]{0}', space=vmem, size = 0x2000, scoped, tag = 'input window, operand 1']
    #allocation6 [shape = 's32[2]{0}', space=sflag, size = 0x8, scoped, tag = 'scoped memory for tpu_custom_call.1']
    #allocation7 [shape = 'u8[8192]{0}', space=vmem, size = 0x2000, scoped, tag = 'input window, operand 2']
    #allocation8 [shape = 'u8[8192]{0}', space=vmem, size = 0x2000, scoped, tag = 'input window, operand 3, single buffered']
    #allocation9 [shape = 's32[1]{0}', space=sflag, size = 0x4, scoped, tag = 'scoped memory for tpu_custom_call.1']
    #allocation10 [shape = 'u8[2048]{0}', space=vmem, size = 0x800, scoped, tag = 'input window, operand 6, single buffered']
    #allocation11 [shape = 'u8[8192]{0}', space=vmem, size = 0x2000, scoped, tag = 'input window, operand 7, single buffered']
    #allocation12 [shape = 's32[1]{0}', space=sflag, size = 0x4, scoped, tag = 'scoped memory for tpu_custom_call.1']
    #allocation13 [shape = 'u8[16384]{0}', space=vmem, size = 0x4000, scoped, tag = 'input window, operand 8, single buffered']
    #allocation14 [shape = 'u8[16384]{0}', space=vmem, size = 0x4000, scoped, tag = 'input window, operand 9, single buffered']
    #allocation15 [shape = 's32[1]{0}', space=sflag, size = 0x4, scoped, tag = 'scoped memory for tpu_custom_call.1']
    #allocation16 [shape = 'u8[4096]{0}', space=vmem, size = 0x1000, scoped, tag = 'input window, operand 11, single buffered']
    #allocation17 [shape = 'u8[2048]{0}', space=vmem, size = 0x800, scoped, tag = 'input window, operand 13, single buffered']
    #allocation18 [shape = 's32[1]{0}', space=sflag, size = 0x4, scoped, tag = 'scoped memory for tpu_custom_call.1']
    #allocation19 [shape = 'u8[4096]{0}', space=vmem, size = 0x1000, scoped, tag = 'input window, operand 14, single buffered']
    #allocation20 [shape = 'u8[8192]{0}', space=vmem, size = 0x2000, scoped, tag = 'output window, operand 0']
    #allocation21 [shape = 'u8[8192]{0}', space=vmem, size = 0x2000, scoped, tag = 'output window, operand 1']
    #allocation22 [shape = 's32[2]{0}', space=sflag, size = 0x8, scoped, tag = 'scoped memory for tpu_custom_call.1']
    %23 = vsyncpa [#allocation3], 0
    %s24 = scalar_lea.sflag [#allocation3], 1
    %25 = vsyncpa %s24, 0
    %26 = vsyncpa [#allocation6], 0
    %s27 = scalar_lea.sflag [#allocation6], 1
    %28 = vsyncpa %s27, 0
    %29 = vsyncpa [#allocation9], 0
    %30 = vsyncpa [#allocation12], 0
    %31 = vsyncpa [#allocation15], 0
    %32 = vsyncpa [#allocation18], 0
    %33 = vsyncpa [#allocation4], 0
    %s34 = scalar_lea.sflag [#allocation4], 1
    %35 = vsyncpa %s34, 0
    %36 = vsyncpa [#allocation22], 0
    %s37 = scalar_lea.sflag [#allocation22], 1
    %38 = vsyncpa %s37, 0
    loop: start=0, step=1, limit=14
    $region2: #{tpu_custom_call.1} parent=1 // loop_pre_header
      _
    $region3: #{tpu_custom_call.1} parent=1 // loop_header
      %s40 = sphi 0, %s44
      %p41 = scmp.ge.s32.totalorder %s40, 14
      %s47 = sphi 0, %s59
      %s48 = sphi 0, %s55
      %s49 = sphi 0, %s47
      %s50 = sphi 0, %s48
      %s51 = sphi 0, %s49
      %s52 = sphi 0, %s50
      %s64 = sphi 0, %s66
      %s67 = sphi 0, %s64
      %s68 = sphi 0, %s67
      %s84 = sphi 0, %s68
      %s90 = sphi 0, %s92
      %s93 = sphi 0, %s90
      %s94 = sphi 0, %s93
      %s110 = sphi 0, %s94
      %s118 = sphi 0, %s120
      %s121 = sphi 0, %s118
      %s122 = sphi 0, %s121
      %s138 = sphi 0, %s122
      %s142 = sphi 0, %s142
      %s144 = sphi 0, %s142
      %s145 = sphi 0, %s144
      %s159 = sphi 0, %s145
      %s163 = sphi 0, %s163
      %s165 = sphi 0, %s163
      %s166 = sphi 0, %s165
      %s180 = sphi 0, %s166
      %s184 = sphi 0, %s184
      %s186 = sphi 0, %s184
      %s187 = sphi 0, %s186
      %s201 = sphi 0, %s187
      %s205 = sphi 0, %s205
      %s207 = sphi 0, %s205
      %s208 = sphi 0, %s207
      %s222 = sphi 0, %s208
      %s226 = sphi 0, %s226
      %s228 = sphi 0, %s226
      %s229 = sphi 0, %s228
      %s243 = sphi 0, %s229
      %s247 = sphi 0, %s247
      %s249 = sphi 0, %s247
      %s250 = sphi 0, %s249
      %s264 = sphi 0, %s250
      %s268 = sphi 0, %s268
      %s270 = sphi 0, %s268
      %s271 = sphi 0, %s270
      %s285 = sphi 0, %s271
      %s289 = sphi 0, %s289
      %s291 = sphi 0, %s289
      %s292 = sphi 0, %s291
      %s306 = sphi 0, %s292
      %s310 = sphi 0, %s310
      %s312 = sphi 0, %s310
      %s313 = sphi 0, %s312
      %s327 = sphi 0, %s313
      %s331 = sphi 0, %s331
      %s333 = sphi 0, %s331
      %s334 = sphi 0, %s333
      %s348 = sphi 0, %s334
      %s352 = sphi 0, %s352
      %s354 = sphi 0, %s352
      %s355 = sphi 0, %s354
      %s369 = sphi 0, %s355
      %s373 = sphi 0, %s373
      %s375 = sphi 0, %s373
      %s376 = sphi 0, %s375
      %s390 = sphi 0, %s376
      %s394 = sphi 0, %s394
      %s396 = sphi 0, %s394
      %s397 = sphi 0, %s396
      %s411 = sphi 0, %s397
      %s419 = sphi 0, %s421
      %s422 = sphi 0, %s419
      %s423 = sphi 0, %s422
      %s439 = sphi 0, %s423
      %s445 = sphi 0, %s447
      %s448 = sphi 0, %s445
      %s449 = sphi 0, %s448
      %s465 = sphi 0, %s449
    $region4: #{tpu_custom_call.1} parent=1 // loop_header_branch
      %43 = sbr.rel (%p41) target = $region8
    $region5: #{tpu_custom_call.1} parent=1 // loop_body
      %s45 = ssub.s32 %s40, 1
      %s46 = ssub.s32 %s40, 2
      %s53 = sadd.s32 1, %s48
      %p54 = scmp.ge.s32.totalorder %s53, 6
      %s55 = scalar_select %p54, 0, %s53
      %s56 = sadd.s32 1, %s47
      %s57 = scalar_select %p54, %s56, %s47
      %p58 = scmp.ge.s32.totalorder %s57, 2
      %s59 = scalar_select %p58, 0, %s57
      %s60 = ssub.s32 %s48, %s55
      %s61 = ssub.s32 %s47, %s59
      %s62 = sor.u32 %s60, %s61
      %p63 = scmp.eq.s32.totalorder %s62, 0
      %s65 = sadd.s32 %s64, 1
      %s66 = scalar_select %p63, %s64, %s65
      %p69 = pneg %p63
      %p70 = scmp.eq.s32.totalorder %s40, 11
      %p71 = por %p69, %p70
      %p72 = scmp.ne.s32.totalorder %s64, %s67
      %p73 = scmp.eq.s32.totalorder %s40, 0
      %p74 = por %p72, %p73
      %p75 = scmp.ne.s32.totalorder %s64, %s67
      %p76 = scmp.eq.s32.totalorder %s45, 11
      %p77 = por %p75, %p76
      %p78 = scmp.ne.s32.totalorder %s67, %s68
      %p79 = scmp.eq.s32.totalorder %s45, 0
      %p80 = por %p78, %p79
      %p81 = scmp.ne.s32.totalorder %s67, %s68
      %p82 = scmp.eq.s32.totalorder %s46, 11
      %p83 = por %p81, %p82
      %p85 = scmp.ne.s32.totalorder %s68, %s84
      %p86 = scmp.eq.s32.totalorder %s46, 0
      %p87 = por %p85, %p86
      %s88 = ssub.s32 %s47, %s59
      %p89 = scmp.eq.s32.totalorder %s88, 0
      %s91 = sadd.s32 %s90, 1
      %s92 = scalar_select %p89, %s90, %s91
      %p95 = pneg %p89
      %p96 = scmp.eq.s32.totalorder %s40, 11
      %p97 = por %p95, %p96
      %p98 = scmp.ne.s32.totalorder %s90, %s93
      %p99 = scmp.eq.s32.totalorder %s40, 0
      %p100 = por %p98, %p99
      %p101 = scmp.ne.s32.totalorder %s90, %s93
      %p102 = scmp.eq.s32.totalorder %s45, 11
      %p103 = por %p101, %p102
      %p104 = scmp.ne.s32.totalorder %s93, %s94
      %p105 = scmp.eq.s32.totalorder %s45, 0
      %p106 = por %p104, %p105
      %p107 = scmp.ne.s32.totalorder %s93, %s94
      %p108 = scmp.eq.s32.totalorder %s46, 11
      %p109 = por %p107, %p108
      %p111 = scmp.ne.s32.totalorder %s94, %s110
      %p112 = scmp.eq.s32.totalorder %s46, 0
      %p113 = por %p111, %p112
      %s114 = ssub.s32 %s48, %s55
      %s115 = ssub.s32 %s47, %s59
      %s116 = sor.u32 %s114, %s115
      %p117 = scmp.eq.s32.totalorder %s116, 0
      %s119 = sadd.s32 %s118, 1
      %s120 = scalar_select %p117, %s118, %s119
      %p123 = pneg %p117
      %p124 = scmp.eq.s32.totalorder %s40, 11
      %p125 = por %p123, %p124
      %p126 = scmp.ne.s32.totalorder %s118, %s121
      %p127 = scmp.eq.s32.totalorder %s40, 0
      %p128 = por %p126, %p127
      %p129 = scmp.ne.s32.totalorder %s118, %s121
      %p130 = scmp.eq.s32.totalorder %s45, 11
      %p131 = por %p129, %p130
      %p132 = scmp.ne.s32.totalorder %s121, %s122
      %p133 = scmp.eq.s32.totalorder %s45, 0
      %p134 = por %p132, %p133
      %p135 = scmp.ne.s32.totalorder %s121, %s122
      %p136 = scmp.eq.s32.totalorder %s46, 11
      %p137 = por %p135, %p136
      %p139 = scmp.ne.s32.totalorder %s122, %s138
      %p140 = scmp.eq.s32.totalorder %s46, 0
      %p141 = por %p139, %p140
      %s143 = sadd.s32 %s142, 1
      %p146 = scmp.eq.s32.totalorder %s40, 11
      %p147 = scmp.ne.s32.totalorder %s142, %s144
      %p148 = scmp.eq.s32.totalorder %s40, 0
      %p149 = por %p147, %p148
      %p150 = scmp.ne.s32.totalorder %s142, %s144
      %p151 = scmp.eq.s32.totalorder %s45, 11
      %p152 = por %p150, %p151
      %p153 = scmp.ne.s32.totalorder %s144, %s145
      %p154 = scmp.eq.s32.totalorder %s45, 0
      %p155 = por %p153, %p154
      %p156 = scmp.ne.s32.totalorder %s144, %s145
      %p157 = scmp.eq.s32.totalorder %s46, 11
      %p158 = por %p156, %p157
      %p160 = scmp.ne.s32.totalorder %s145, %s159
      %p161 = scmp.eq.s32.totalorder %s46, 0
      %p162 = por %p160, %p161
      %s164 = sadd.s32 %s163, 1
      %p167 = scmp.eq.s32.totalorder %s40, 11
      %p168 = scmp.ne.s32.totalorder %s163, %s165
      %p169 = scmp.eq.s32.totalorder %s40, 0
      %p170 = por %p168, %p169
      %p171 = scmp.ne.s32.totalorder %s163, %s165
      %p172 = scmp.eq.s32.totalorder %s45, 11
      %p173 = por %p171, %p172
      %p174 = scmp.ne.s32.totalorder %s165, %s166
      %p175 = scmp.eq.s32.totalorder %s45, 0
      %p176 = por %p174, %p175
      %p177 = scmp.ne.s32.totalorder %s165, %s166
      %p178 = scmp.eq.s32.totalorder %s46, 11
      %p179 = por %p177, %p178
      %p181 = scmp.ne.s32.totalorder %s166, %s180
      %p182 = scmp.eq.s32.totalorder %s46, 0
      %p183 = por %p181, %p182
      %s185 = sadd.s32 %s184, 1
      %p188 = scmp.eq.s32.totalorder %s40, 11
      %p189 = scmp.ne.s32.totalorder %s184, %s186
      %p190 = scmp.eq.s32.totalorder %s40, 0
      %p191 = por %p189, %p190
      %p192 = scmp.ne.s32.totalorder %s184, %s186
      %p193 = scmp.eq.s32.totalorder %s45, 11
      %p194 = por %p192, %p193
      %p195 = scmp.ne.s32.totalorder %s186, %s187
      %p196 = scmp.eq.s32.totalorder %s45, 0
      %p197 = por %p195, %p196
      %p198 = scmp.ne.s32.totalorder %s186, %s187
      %p199 = scmp.eq.s32.totalorder %s46, 11
      %p200 = por %p198, %p199
      %p202 = scmp.ne.s32.totalorder %s187, %s201
      %p203 = scmp.eq.s32.totalorder %s46, 0
      %p204 = por %p202, %p203
      %s206 = sadd.s32 %s205, 1
      %p209 = scmp.eq.s32.totalorder %s40, 11
      %p210 = scmp.ne.s32.totalorder %s205, %s207
      %p211 = scmp.eq.s32.totalorder %s40, 0
      %p212 = por %p210, %p211
      %p213 = scmp.ne.s32.totalorder %s205, %s207
      %p214 = scmp.eq.s32.totalorder %s45, 11
      %p215 = por %p213, %p214
      %p216 = scmp.ne.s32.totalorder %s207, %s208
      %p217 = scmp.eq.s32.totalorder %s45, 0
      %p218 = por %p216, %p217
      %p219 = scmp.ne.s32.totalorder %s207, %s208
      %p220 = scmp.eq.s32.totalorder %s46, 11
      %p221 = por %p219, %p220
      %p223 = scmp.ne.s32.totalorder %s208, %s222
      %p224 = scmp.eq.s32.totalorder %s46, 0
      %p225 = por %p223, %p224
      %s227 = sadd.s32 %s226, 1
      %p230 = scmp.eq.s32.totalorder %s40, 11
      %p231 = scmp.ne.s32.totalorder %s226, %s228
      %p232 = scmp.eq.s32.totalorder %s40, 0
      %p233 = por %p231, %p232
      %p234 = scmp.ne.s32.totalorder %s226, %s228
      %p235 = scmp.eq.s32.totalorder %s45, 11
      %p236 = por %p234, %p235
      %p237 = scmp.ne.s32.totalorder %s228, %s229
      %p238 = scmp.eq.s32.totalorder %s45, 0
      %p239 = por %p237, %p238
      %p240 = scmp.ne.s32.totalorder %s228, %s229
      %p241 = scmp.eq.s32.totalorder %s46, 11
      %p242 = por %p240, %p241
      %p244 = scmp.ne.s32.totalorder %s229, %s243
      %p245 = scmp.eq.s32.totalorder %s46, 0
      %p246 = por %p244, %p245
      %s248 = sadd.s32 %s247, 1
      %p251 = scmp.eq.s32.totalorder %s40, 11
      %p252 = scmp.ne.s32.totalorder %s247, %s249
      %p253 = scmp.eq.s32.totalorder %s40, 0
      %p254 = por %p252, %p253
      %p255 = scmp.ne.s32.totalorder %s247, %s249
      %p256 = scmp.eq.s32.totalorder %s45, 11
      %p257 = por %p255, %p256
      %p258 = scmp.ne.s32.totalorder %s249, %s250
      %p259 = scmp.eq.s32.totalorder %s45, 0
      %p260 = por %p258, %p259
      %p261 = scmp.ne.s32.totalorder %s249, %s250
      %p262 = scmp.eq.s32.totalorder %s46, 11
      %p263 = por %p261, %p262
      %p265 = scmp.ne.s32.totalorder %s250, %s264
      %p266 = scmp.eq.s32.totalorder %s46, 0
      %p267 = por %p265, %p266
      %s269 = sadd.s32 %s268, 1
      %p272 = scmp.eq.s32.totalorder %s40, 11
      %p273 = scmp.ne.s32.totalorder %s268, %s270
      %p274 = scmp.eq.s32.totalorder %s40, 0
      %p275 = por %p273, %p274
      %p276 = scmp.ne.s32.totalorder %s268, %s270
      %p277 = scmp.eq.s32.totalorder %s45, 11
      %p278 = por %p276, %p277
      %p279 = scmp.ne.s32.totalorder %s270, %s271
      %p280 = scmp.eq.s32.totalorder %s45, 0
      %p281 = por %p279, %p280
      %p282 = scmp.ne.s32.totalorder %s270, %s271
      %p283 = scmp.eq.s32.totalorder %s46, 11
      %p284 = por %p282, %p283
      %p286 = scmp.ne.s32.totalorder %s271, %s285
      %p287 = scmp.eq.s32.totalorder %s46, 0
      %p288 = por %p286, %p287
      %s290 = sadd.s32 %s289, 1
      %p293 = scmp.eq.s32.totalorder %s40, 11
      %p294 = scmp.ne.s32.totalorder %s289, %s291
      %p295 = scmp.eq.s32.totalorder %s40, 0
      %p296 = por %p294, %p295
      %p297 = scmp.ne.s32.totalorder %s289, %s291
      %p298 = scmp.eq.s32.totalorder %s45, 11
      %p299 = por %p297, %p298
      %p300 = scmp.ne.s32.totalorder %s291, %s292
      %p301 = scmp.eq.s32.totalorder %s45, 0
      %p302 = por %p300, %p301
      %p303 = scmp.ne.s32.totalorder %s291, %s292
      %p304 = scmp.eq.s32.totalorder %s46, 11
      %p305 = por %p303, %p304
      %p307 = scmp.ne.s32.totalorder %s292, %s306
      %p308 = scmp.eq.s32.totalorder %s46, 0
      %p309 = por %p307, %p308
      %s311 = sadd.s32 %s310, 1
      %p314 = scmp.eq.s32.totalorder %s40, 11
      %p315 = scmp.ne.s32.totalorder %s310, %s312
      %p316 = scmp.eq.s32.totalorder %s40, 0
      %p317 = por %p315, %p316
      %p318 = scmp.ne.s32.totalorder %s310, %s312
      %p319 = scmp.eq.s32.totalorder %s45, 11
      %p320 = por %p318, %p319
      %p321 = scmp.ne.s32.totalorder %s312, %s313
      %p322 = scmp.eq.s32.totalorder %s45, 0
      %p323 = por %p321, %p322
      %p324 = scmp.ne.s32.totalorder %s312, %s313
      %p325 = scmp.eq.s32.totalorder %s46, 11
      %p326 = por %p324, %p325
      %p328 = scmp.ne.s32.totalorder %s313, %s327
      %p329 = scmp.eq.s32.totalorder %s46, 0
      %p330 = por %p328, %p329
      %s332 = sadd.s32 %s331, 1
      %p335 = scmp.eq.s32.totalorder %s40, 11
      %p336 = scmp.ne.s32.totalorder %s331, %s333
      %p337 = scmp.eq.s32.totalorder %s40, 0
      %p338 = por %p336, %p337
      %p339 = scmp.ne.s32.totalorder %s331, %s333
      %p340 = scmp.eq.s32.totalorder %s45, 11
      %p341 = por %p339, %p340
      %p342 = scmp.ne.s32.totalorder %s333, %s334
      %p343 = scmp.eq.s32.totalorder %s45, 0
      %p344 = por %p342, %p343
      %p345 = scmp.ne.s32.totalorder %s333, %s334
      %p346 = scmp.eq.s32.totalorder %s46, 11
      %p347 = por %p345, %p346
      %p349 = scmp.ne.s32.totalorder %s334, %s348
      %p350 = scmp.eq.s32.totalorder %s46, 0
      %p351 = por %p349, %p350
      %s353 = sadd.s32 %s352, 1
      %p356 = scmp.eq.s32.totalorder %s40, 11
      %p357 = scmp.ne.s32.totalorder %s352, %s354
      %p358 = scmp.eq.s32.totalorder %s40, 0
      %p359 = por %p357, %p358
      %p360 = scmp.ne.s32.totalorder %s352, %s354
      %p361 = scmp.eq.s32.totalorder %s45, 11
      %p362 = por %p360, %p361
      %p363 = scmp.ne.s32.totalorder %s354, %s355
      %p364 = scmp.eq.s32.totalorder %s45, 0
      %p365 = por %p363, %p364
      %p366 = scmp.ne.s32.totalorder %s354, %s355
      %p367 = scmp.eq.s32.totalorder %s46, 11
      %p368 = por %p366, %p367
      %p370 = scmp.ne.s32.totalorder %s355, %s369
      %p371 = scmp.eq.s32.totalorder %s46, 0
      %p372 = por %p370, %p371
      %s374 = sadd.s32 %s373, 1
      %p377 = scmp.eq.s32.totalorder %s40, 11
      %p378 = scmp.ne.s32.totalorder %s373, %s375
      %p379 = scmp.eq.s32.totalorder %s40, 0
      %p380 = por %p378, %p379
      %p381 = scmp.ne.s32.totalorder %s373, %s375
      %p382 = scmp.eq.s32.totalorder %s45, 11
      %p383 = por %p381, %p382
      %p384 = scmp.ne.s32.totalorder %s375, %s376
      %p385 = scmp.eq.s32.totalorder %s45, 0
      %p386 = por %p384, %p385
      %p387 = scmp.ne.s32.totalorder %s375, %s376
      %p388 = scmp.eq.s32.totalorder %s46, 11
      %p389 = por %p387, %p388
      %p391 = scmp.ne.s32.totalorder %s376, %s390
      %p392 = scmp.eq.s32.totalorder %s46, 0
      %p393 = por %p391, %p392
      %s395 = sadd.s32 %s394, 1
      %p398 = scmp.eq.s32.totalorder %s40, 11
      %p399 = scmp.ne.s32.totalorder %s394, %s396
      %p400 = scmp.eq.s32.totalorder %s40, 0
      %p401 = por %p399, %p400
      %p402 = scmp.ne.s32.totalorder %s394, %s396
      %p403 = scmp.eq.s32.totalorder %s45, 11
      %p404 = por %p402, %p403
      %p405 = scmp.ne.s32.totalorder %s396, %s397
      %p406 = scmp.eq.s32.totalorder %s45, 0
      %p407 = por %p405, %p406
      %p408 = scmp.ne.s32.totalorder %s396, %s397
      %p409 = scmp.eq.s32.totalorder %s46, 11
      %p410 = por %p408, %p409
      %p412 = scmp.ne.s32.totalorder %s397, %s411
      %p413 = scmp.eq.s32.totalorder %s46, 0
      %p414 = por %p412, %p413
      %s415 = ssub.s32 %s48, %s55
      %s416 = ssub.s32 %s47, %s59
      %s417 = sor.u32 %s415, %s416
      %p418 = scmp.eq.s32.totalorder %s417, 0
      %s420 = sadd.s32 %s419, 1
      %s421 = scalar_select %p418, %s419, %s420
      %p424 = pneg %p418
      %p425 = scmp.eq.s32.totalorder %s40, 11
      %p426 = por %p424, %p425
      %p427 = scmp.ne.s32.totalorder %s419, %s422
      %p428 = scmp.eq.s32.totalorder %s40, 0
      %p429 = por %p427, %p428
      %p430 = scmp.ne.s32.totalorder %s419, %s422
      %p431 = scmp.eq.s32.totalorder %s45, 11
      %p432 = por %p430, %p431
      %p433 = scmp.ne.s32.totalorder %s422, %s423
      %p434 = scmp.eq.s32.totalorder %s45, 0
      %p435 = por %p433, %p434
      %p436 = scmp.ne.s32.totalorder %s422, %s423
      %p437 = scmp.eq.s32.totalorder %s46, 11
      %p438 = por %p436, %p437
      %p440 = scmp.ne.s32.totalorder %s423, %s439
      %p441 = scmp.eq.s32.totalorder %s46, 0
      %p442 = por %p440, %p441
      %s443 = ssub.s32 %s47, %s59
      %p444 = scmp.eq.s32.totalorder %s443, 0
      %s446 = sadd.s32 %s445, 1
      %s447 = scalar_select %p444, %s445, %s446
      %p450 = pneg %p444
      %p451 = scmp.eq.s32.totalorder %s40, 11
      %p452 = por %p450, %p451
      %p453 = scmp.ne.s32.totalorder %s445, %s448
      %p454 = scmp.eq.s32.totalorder %s40, 0
      %p455 = por %p453, %p454
      %p456 = scmp.ne.s32.totalorder %s445, %s448
      %p457 = scmp.eq.s32.totalorder %s45, 11
      %p458 = por %p456, %p457
      %p459 = scmp.ne.s32.totalorder %s448, %s449
      %p460 = scmp.eq.s32.totalorder %s45, 0
      %p461 = por %p459, %p460
      %p462 = scmp.ne.s32.totalorder %s448, %s449
      %p463 = scmp.eq.s32.totalorder %s46, 11
      %p464 = por %p462, %p463
      %p466 = scmp.ne.s32.totalorder %s449, %s465
      %p467 = scmp.eq.s32.totalorder %s46, 0
      %p468 = por %p466, %p467
      %p469 = scmp.le.s32.totalorder 1, %s40
      %p470 = scmp.lt.s32.totalorder %s40, 13
      %p471 = pnand %p469, %p470
      %p472 = pneg %p471
      // Predicated region
      $region9: #{tpu_custom_call.1} parent=5 // pred_check
        _
      $region10: #{tpu_custom_call.1} parent=5 // pred_check_branch
        %474 = sbr.rel (%p471) target = $region12
      $region11: #{tpu_custom_call.1} parent=5 // pred_region
        %s475 = ssub.s32 %s40, 1
        // Predicated region
        $region13: #{tpu_custom_call.1} parent=11 // pred_check
          %p476 = pneg %p155
        $region14: #{tpu_custom_call.1} parent=11 // pred_check_branch
          %478 = sbr.rel (%p476) target = $region16
        $region15: #{tpu_custom_call.1} parent=11 // pred_region
          %s480 = ssub.s32 256, 256
          %481 = vsyncadd [#allocation9], %s480
          %s482 = sshll.u32 [#allocation8], 4
          %s483 = int_to_ptr.vmem [resolvable:$true] %s482
          %488 = dma.hbm_to_vmem [thread:$0]  %s3, 256, %s483, [#allocation9], 128, 128, 8
        $region16: #{tpu_custom_call.1} parent=11 // pred_fallthru
          _
        // Predicated region
        $region17: #{tpu_custom_call.1} parent=11 // pred_check
          %p489 = pneg %p176
        $region18: #{tpu_custom_call.1} parent=11 // pred_check_branch
          %491 = sbr.rel (%p489) target = $region20
        $region19: #{tpu_custom_call.1} parent=11 // pred_region
          _
        $region20: #{tpu_custom_call.1} parent=11 // pred_fallthru
          _
        // Predicated region
        $region21: #{tpu_custom_call.1} parent=11 // pred_check
          %p492 = pneg %p197
        $region22: #{tpu_custom_call.1} parent=11 // pred_check_branch
          %494 = sbr.rel (%p492) target = $region24
        $region23: #{tpu_custom_call.1} parent=11 // pred_region
          _
        $region24: #{tpu_custom_call.1} parent=11 // pred_fallthru
          _
        // Predicated region
        $region25: #{tpu_custom_call.1} parent=11 // pred_check
          %p495 = pneg %p218
        $region26: #{tpu_custom_call.1} parent=11 // pred_check_branch
          %497 = sbr.rel (%p495) target = $region28
        $region27: #{tpu_custom_call.1} parent=11 // pred_region
          %s499 = ssub.s32 64, 64
          %500 = vsyncadd [#allocation9], %s499
          %s502 = sshll.u32 [#allocation10], 4
          %s503 = int_to_ptr.vmem [resolvable:$true] %s502
          %505 = dma.hbm_to_vmem [thread:$0]  %s6, 64, %s503, [#allocation9]
        $region28: #{tpu_custom_call.1} parent=11 // pred_fallthru
          _
        // Predicated region
        $region29: #{tpu_custom_call.1} parent=11 // pred_check
          %p506 = pneg %p239
        $region30: #{tpu_custom_call.1} parent=11 // pred_check_branch
          %508 = sbr.rel (%p506) target = $region32
        $region31: #{tpu_custom_call.1} parent=11 // pred_region
          %s510 = ssub.s32 256, 256
          %511 = vsyncadd [#allocation12], %s510
          %s512 = sshll.u32 [#allocation11], 4
          %s513 = int_to_ptr.vmem [resolvable:$true] %s512
          %518 = dma.hbm_to_vmem [thread:$0]  %s7, 256, %s513, [#allocation12], 128, 128, 8
        $region32: #{tpu_custom_call.1} parent=11 // pred_fallthru
          _
        // Predicated region
        $region33: #{tpu_custom_call.1} parent=11 // pred_check
          %p519 = pneg %p260
        $region34: #{tpu_custom_call.1} parent=11 // pred_check_branch
          %521 = sbr.rel (%p519) target = $region36
        $region35: #{tpu_custom_call.1} parent=11 // pred_region
          %s523 = ssub.s32 512, 512
          %524 = vsyncadd [#allocation12], %s523
          %s525 = sshll.u32 [#allocation13], 4
          %s526 = int_to_ptr.vmem [resolvable:$true] %s525
          %531 = dma.hbm_to_vmem [thread:$0]  %s8, 512, %s526, [#allocation12], 256, 256, 16
        $region36: #{tpu_custom_call.1} parent=11 // pred_fallthru
          _
        // Predicated region
        $region37: #{tpu_custom_call.1} parent=11 // pred_check
          %p532 = pneg %p281
        $region38: #{tpu_custom_call.1} parent=11 // pred_check_branch
          %534 = sbr.rel (%p532) target = $region40
        $region39: #{tpu_custom_call.1} parent=11 // pred_region
          %s536 = ssub.s32 512, 512
          %537 = vsyncadd [#allocation15], %s536
          %s538 = sshll.u32 [#allocation14], 4
          %s539 = int_to_ptr.vmem [resolvable:$true] %s538
          %544 = dma.hbm_to_vmem [thread:$0]  %s9, 512, %s539, [#allocation15], 128, 128, 8
        $region40: #{tpu_custom_call.1} parent=11 // pred_fallthru
          _
        // Predicated region
        $region41: #{tpu_custom_call.1} parent=11 // pred_check
          %p545 = pneg %p302
        $region42: #{tpu_custom_call.1} parent=11 // pred_check_branch
          %547 = sbr.rel (%p545) target = $region44
        $region43: #{tpu_custom_call.1} parent=11 // pred_region
          _
        $region44: #{tpu_custom_call.1} parent=11 // pred_fallthru
          _
        // Predicated region
        $region45: #{tpu_custom_call.1} parent=11 // pred_check
          %p548 = pneg %p323
        $region46: #{tpu_custom_call.1} parent=11 // pred_check_branch
          %550 = sbr.rel (%p548) target = $region48
        $region47: #{tpu_custom_call.1} parent=11 // pred_region
          %s552 = ssub.s32 128, 128
          %553 = vsyncadd [#allocation15], %s552
          %s555 = sshll.u32 [#allocation16], 4
          %s556 = int_to_ptr.vmem [resolvable:$true] %s555
          %558 = dma.hbm_to_vmem [thread:$0]  %s11, 128, %s556, [#allocation15]
        $region48: #{tpu_custom_call.1} parent=11 // pred_fallthru
          _
        // Predicated region
        $region49: #{tpu_custom_call.1} parent=11 // pred_check
          %p559 = pneg %p344
        $region50: #{tpu_custom_call.1} parent=11 // pred_check_branch
          %561 = sbr.rel (%p559) target = $region52
        $region51: #{tpu_custom_call.1} parent=11 // pred_region
          _
        $region52: #{tpu_custom_call.1} parent=11 // pred_fallthru
          _
        // Predicated region
        $region53: #{tpu_custom_call.1} parent=11 // pred_check
          %p562 = pneg %p365
        $region54: #{tpu_custom_call.1} parent=11 // pred_check_branch
          %564 = sbr.rel (%p562) target = $region56
        $region55: #{tpu_custom_call.1} parent=11 // pred_region
          %s566 = ssub.s32 64, 64
          %567 = vsyncadd [#allocation18], %s566
          %s569 = sshll.u32 [#allocation17], 4
          %s570 = int_to_ptr.vmem [resolvable:$true] %s569
          %572 = dma.hbm_to_vmem [thread:$0]  %s13, 64, %s570, [#allocation18]
        $region56: #{tpu_custom_call.1} parent=11 // pred_fallthru
          _
        // Predicated region
        $region57: #{tpu_custom_call.1} parent=11 // pred_check
          %p573 = pneg %p386
        $region58: #{tpu_custom_call.1} parent=11 // pred_check_branch
          %575 = sbr.rel (%p573) target = $region60
        $region59: #{tpu_custom_call.1} parent=11 // pred_region
          %s577 = ssub.s32 128, 128
          %578 = vsyncadd [#allocation18], %s577
          %s580 = sshll.u32 [#allocation19], 4
          %s581 = int_to_ptr.vmem [resolvable:$true] %s580
          %583 = dma.hbm_to_vmem [thread:$0]  %s14, 128, %s581, [#allocation18]
        $region60: #{tpu_custom_call.1} parent=11 // pred_fallthru
          _
        // Predicated region
        $region61: #{tpu_custom_call.1} parent=11 // pred_check
          %p584 = pneg %p407
        $region62: #{tpu_custom_call.1} parent=11 // pred_check_branch
          %586 = sbr.rel (%p584) target = $region64
        $region63: #{tpu_custom_call.1} parent=11 // pred_region
          _
        $region64: #{tpu_custom_call.1} parent=11 // pred_fallthru
          _
      $region12: #{tpu_custom_call.1} parent=5 // pred_fallthru
        _
      %p587 = scmp.lt.s32.totalorder %s40, 12
      // Predicated region
      $region65: #{tpu_custom_call.1} parent=5 // pred_check
        %p588 = pneg %p587
      $region66: #{tpu_custom_call.1} parent=5 // pred_check_branch
        %590 = sbr.rel (%p588) target = $region68
      $region67: #{tpu_custom_call.1} parent=5 // pred_region
        // Predicated region
        $region69: #{tpu_custom_call.1} parent=67 // pred_check
          %p591 = pneg %p74
        $region70: #{tpu_custom_call.1} parent=67 // pred_check_branch
          %593 = sbr.rel (%p591) target = $region72
        $region71: #{tpu_custom_call.1} parent=67 // pred_region
          %s594 = sand.u32 %s64, 1
          %s595 = scalar_lea.sflag [#allocation3], %s594
          %s596 = sand.u32 %s64, 1
          %s597 = smul.addr %s596, 8
          %s598 = scalar_lea.vmem [#allocation2], %s597
          %s600 = ssub.s32 128, 128
          %601 = vsyncadd %s595, %s600
          %s602 = smul.addr %s48, 2
          %s603 = sadd.s32 %s47, %s602
          %s604 = smul.addr %s603, 128
          %s605 = scalar_lea.hbm %s0, %s604
          %s607 = sshll.u32 %s598, 4
          %s608 = int_to_ptr.vmem [resolvable:$true] %s607
          %610 = dma.hbm_to_vmem [thread:$0]  %s605, 128, %s608, %s595
        $region72: #{tpu_custom_call.1} parent=67 // pred_fallthru
          _
        // Predicated region
        $region73: #{tpu_custom_call.1} parent=67 // pred_check
          %p611 = pneg %p100
        $region74: #{tpu_custom_call.1} parent=67 // pred_check_branch
          %613 = sbr.rel (%p611) target = $region76
        $region75: #{tpu_custom_call.1} parent=67 // pred_region
          %s614 = sand.u32 %s40, 1
          %s615 = scalar_lea.sflag [#allocation6], %s614
          %s616 = sand.u32 %s90, 1
          %s617 = smul.addr %s616, 8
          %s618 = scalar_lea.vmem [#allocation5], %s617
          %s620 = ssub.s32 128, 128
          %621 = vsyncadd %s615, %s620
          %s622 = smul.addr %s47, 128
          %s623 = scalar_lea.hbm %s1, %s622
          %s625 = sshll.u32 %s618, 4
          %s626 = int_to_ptr.vmem [resolvable:$true] %s625
          %628 = dma.hbm_to_vmem [thread:$0]  %s623, 128, %s626, %s615
        $region76: #{tpu_custom_call.1} parent=67 // pred_fallthru
          _
        // Predicated region
        $region77: #{tpu_custom_call.1} parent=67 // pred_check
          %p629 = pneg %p128
        $region78: #{tpu_custom_call.1} parent=67 // pred_check_branch
          %631 = sbr.rel (%p629) target = $region80
        $region79: #{tpu_custom_call.1} parent=67 // pred_region
          %s632 = sand.u32 %s40, 1
          %s633 = scalar_lea.sflag [#allocation6], %s632
          %s634 = sand.u32 %s118, 1
          %s635 = smul.addr %s634, 8
          %s636 = scalar_lea.vmem [#allocation7], %s635
          %s638 = ssub.s32 128, 128
          %639 = vsyncadd %s633, %s638
          %s640 = smul.addr %s48, 2
          %s641 = sadd.s32 %s47, %s640
          %s642 = smul.addr %s641, 128
          %s643 = scalar_lea.hbm %s2, %s642
          %s645 = sshll.u32 %s636, 4
          %s646 = int_to_ptr.vmem [resolvable:$true] %s645
          %648 = dma.hbm_to_vmem [thread:$0]  %s643, 128, %s646, %s633
        $region80: #{tpu_custom_call.1} parent=67 // pred_fallthru
          _
      $region68: #{tpu_custom_call.1} parent=5 // pred_fallthru
        _
      %p649 = scmp.le.s32.totalorder 1, %s40
      %p650 = scmp.lt.s32.totalorder %s40, 13
      %p651 = pnand %p649, %p650
      %p652 = pneg %p651
      // Predicated region
      $region81: #{tpu_custom_call.1} parent=5 // pred_check
        _
      $region82: #{tpu_custom_call.1} parent=5 // pred_check_branch
        %654 = sbr.rel (%p651) target = $region84
      $region83: #{tpu_custom_call.1} parent=5 // pred_region
        %s655 = ssub.s32 %s40, 1
        %s656 = sand.u32 %s67, 1
        %s657 = scalar_lea.sflag [#allocation3], %s656
        %s658 = sand.u32 %s67, 1
        %s659 = smul.addr %s658, 8
        %s660 = scalar_lea.vmem [#allocation2], %s659
        // Predicated region
        $region85: #{tpu_custom_call.1} parent=83 // pred_check
          %p661 = pneg %p80
        $region86: #{tpu_custom_call.1} parent=83 // pred_check_branch
          %663 = sbr.rel (%p661) target = $region88
        $region87: #{tpu_custom_call.1} parent=83 // pred_region
          %664 = dma.done %s657, 128
        $region88: #{tpu_custom_call.1} parent=83 // pred_fallthru
          _
        %s665 = sand.u32 %s45, 1
        %s666 = scalar_lea.sflag [#allocation6], %s665
        %s667 = sand.u32 %s93, 1
        %s668 = smul.addr %s667, 8
        %s669 = scalar_lea.vmem [#allocation5], %s668
        // Predicated region
        $region89: #{tpu_custom_call.1} parent=83 // pred_check
          %p670 = pneg %p106
        $region90: #{tpu_custom_call.1} parent=83 // pred_check_branch
          %672 = sbr.rel (%p670) target = $region92
        $region91: #{tpu_custom_call.1} parent=83 // pred_region
          %673 = dma.done %s666, 128
        $region92: #{tpu_custom_call.1} parent=83 // pred_fallthru
          _
        %s674 = sand.u32 %s45, 1
        %s675 = scalar_lea.sflag [#allocation6], %s674
        %s676 = sand.u32 %s121, 1
        %s677 = smul.addr %s676, 8
        %s678 = scalar_lea.vmem [#allocation7], %s677
        // Predicated region
        $region93: #{tpu_custom_call.1} parent=83 // pred_check
          %p679 = pneg %p134
        $region94: #{tpu_custom_call.1} parent=83 // pred_check_branch
          %681 = sbr.rel (%p679) target = $region96
        $region95: #{tpu_custom_call.1} parent=83 // pred_region
          %682 = dma.done %s675, 128
        $region96: #{tpu_custom_call.1} parent=83 // pred_fallthru
          _
        // Predicated region
        $region97: #{tpu_custom_call.1} parent=83 // pred_check
          %p683 = pneg %p155
        $region98: #{tpu_custom_call.1} parent=83 // pred_check_branch
          %685 = sbr.rel (%p683) target = $region100
        $region99: #{tpu_custom_call.1} parent=83 // pred_region
          %686 = dma.done [#allocation9], 256
        $region100: #{tpu_custom_call.1} parent=83 // pred_fallthru
          _
        // Predicated region
        $region101: #{tpu_custom_call.1} parent=83 // pred_check
          %p687 = pneg %p218
        $region102: #{tpu_custom_call.1} parent=83 // pred_check_branch
          %689 = sbr.rel (%p687) target = $region104
        $region103: #{tpu_custom_call.1} parent=83 // pred_region
          %690 = dma.done [#allocation9], 64
        $region104: #{tpu_custom_call.1} parent=83 // pred_fallthru
          _
        // Predicated region
        $region105: #{tpu_custom_call.1} parent=83 // pred_check
          %p691 = pneg %p239
        $region106: #{tpu_custom_call.1} parent=83 // pred_check_branch
          %693 = sbr.rel (%p691) target = $region108
        $region107: #{tpu_custom_call.1} parent=83 // pred_region
          %694 = dma.done [#allocation12], 256
        $region108: #{tpu_custom_call.1} parent=83 // pred_fallthru
          _
        // Predicated region
        $region109: #{tpu_custom_call.1} parent=83 // pred_check
          %p695 = pneg %p260
        $region110: #{tpu_custom_call.1} parent=83 // pred_check_branch
          %697 = sbr.rel (%p695) target = $region112
        $region111: #{tpu_custom_call.1} parent=83 // pred_region
          %698 = dma.done [#allocation12], 512
        $region112: #{tpu_custom_call.1} parent=83 // pred_fallthru
          _
        // Predicated region
        $region113: #{tpu_custom_call.1} parent=83 // pred_check
          %p699 = pneg %p281
        $region114: #{tpu_custom_call.1} parent=83 // pred_check_branch
          %701 = sbr.rel (%p699) target = $region116
        $region115: #{tpu_custom_call.1} parent=83 // pred_region
          %702 = dma.done [#allocation15], 512
        $region116: #{tpu_custom_call.1} parent=83 // pred_fallthru
          _
        // Predicated region
        $region117: #{tpu_custom_call.1} parent=83 // pred_check
          %p703 = pneg %p323
        $region118: #{tpu_custom_call.1} parent=83 // pred_check_branch
          %705 = sbr.rel (%p703) target = $region120
        $region119: #{tpu_custom_call.1} parent=83 // pred_region
          %706 = dma.done [#allocation15], 128
        $region120: #{tpu_custom_call.1} parent=83 // pred_fallthru
          _
        // Predicated region
        $region121: #{tpu_custom_call.1} parent=83 // pred_check
          %p707 = pneg %p365
        $region122: #{tpu_custom_call.1} parent=83 // pred_check_branch
          %709 = sbr.rel (%p707) target = $region124
        $region123: #{tpu_custom_call.1} parent=83 // pred_region
          %710 = dma.done [#allocation18], 64
        $region124: #{tpu_custom_call.1} parent=83 // pred_fallthru
          _
        // Predicated region
        $region125: #{tpu_custom_call.1} parent=83 // pred_check
          %p711 = pneg %p386
        $region126: #{tpu_custom_call.1} parent=83 // pred_check_branch
          %713 = sbr.rel (%p711) target = $region128
        $region127: #{tpu_custom_call.1} parent=83 // pred_region
          %714 = dma.done [#allocation18], 128
        $region128: #{tpu_custom_call.1} parent=83 // pred_fallthru
          _
        %s715 = sand.u32 %s67, 1
        %s716 = scalar_lea.sflag [#allocation3], %s715
        %s717 = sand.u32 %s67, 1
        %s718 = smul.addr %s717, 8
        %s719 = scalar_lea.vmem [#allocation2], %s718
        %p720 = pneg %p80
        %p721 = pneg %p77
        %s722 = sand.u32 %s45, 1
        %s723 = scalar_lea.sflag [#allocation6], %s722
        %s724 = sand.u32 %s93, 1
        %s725 = smul.addr %s724, 8
        %s726 = scalar_lea.vmem [#allocation5], %s725
        %p727 = pneg %p106
        %p728 = pneg %p103
        %s729 = sand.u32 %s45, 1
        %s730 = scalar_lea.sflag [#allocation6], %s729
        %s731 = sand.u32 %s121, 1
        %s732 = smul.addr %s731, 8
        %s733 = scalar_lea.vmem [#allocation7], %s732
        %p734 = pneg %p134
        %p735 = pneg %p131
        %p736 = pneg %p155
        %p737 = pneg %p152
        %p738 = pneg %p176
        %p739 = pneg %p173
        %p740 = pneg %p197
        %p741 = pneg %p194
        %p742 = pneg %p218
        %p743 = pneg %p215
        %p744 = pneg %p239
        %p745 = pneg %p236
        %p746 = pneg %p260
        %p747 = pneg %p257
        %p748 = pneg %p281
        %p749 = pneg %p278
        %p750 = pneg %p302
        %p751 = pneg %p299
        %p752 = pneg %p323
        %p753 = pneg %p320
        %p754 = pneg %p344
        %p755 = pneg %p341
        %p756 = pneg %p365
        %p757 = pneg %p362
        %p758 = pneg %p386
        %p759 = pneg %p383
        %p760 = pneg %p407
        %p761 = pneg %p404
        %p762 = pneg %p435
        %p763 = pneg %p432
        %s764 = sand.u32 %s422, 1
        %s765 = scalar_lea.sflag [#allocation4], %s764
        %s766 = sand.u32 %s422, 1
        %s767 = smul.addr %s766, 8
        %s768 = scalar_lea.vmem [#allocation20], %s767
        %p769 = pneg %p461
        %p770 = pneg %p458
        %s771 = sand.u32 %s448, 1
        %s772 = scalar_lea.sflag [#allocation22], %s771
        %s773 = sand.u32 %s448, 1
        %s774 = smul.addr %s773, 8
        %s775 = scalar_lea.vmem [#allocation21], %s774
        %v776 = vld [vmem:[%s660] sm:$0xff]
        %v777 = vld [vmem:[%s678] sm:$0xff]
        %p778 = scmp.eq.s32.totalorder %s50, 0
        // Predicated region
        $region129: #{tpu_custom_call.1} parent=83 // pred_check
          %p779 = pneg %p778
        $region130: #{tpu_custom_call.1} parent=83 // pred_check_branch
          %781 = sbr.rel (%p779) target = $region132
        $region131: #{tpu_custom_call.1} parent=83 // pred_region
          %v782 = vld [vmem:[%s669] sm:$0xff]
          %vm783 = vcmask 261120
          %784 = vst.msk [vmem:[%s775] sm:$0xff] %vm783, %v782
        $region132: #{tpu_custom_call.1} parent=83 // pred_fallthru
          _
        %v785 = vld [vmem:[%s775] sm:$0xff]
        %v786 = vld [vmem:[#allocation8] sm:$0xff]
        %v787 = vld [vmem:[#allocation8 + $0x8] sm:$0xff]
        %v788 = vld [vmem:[%s15] sm:$0x1]
        %v790 = vlaneseq
        %v791 = vshrl.u32 %v790, 7
        %v792 = vsub.s32 0, %v791
        %v793 = vrot.slane %v788, %v792
        %vm795 = vcmask 130048
        %v797 = vsel %vm795, %v776, 0
        %799 = vmatprep.subr.mxu0 0.0
        %800 = vmatpush1.msra.mxu0 0.0
        %801 = vmatprep.subr.mxu0 0.0
        %802 = vmatpush1.msra.mxu0 0.0
        %803 = vmatprep.subr.mxu0 0.0
        %804 = vmatpush1.msra.mxu0 0.0
        %805 = vmatprep.subr.mxu0 0.0
        %806 = vmatpush1.msra.mxu0 0.0
        %807 = vmatprep.subr.mxu0 0.0
        %808 = vmatpush1.msra.mxu0 0.0
        %809 = vmatprep.subr.mxu0 0.0
        %810 = vmatpush1.msra.mxu0 0.0
        %811 = vmatprep.subr.mxu0 0.0
        %812 = vmatpush1.msra.mxu0 0.0
        %813 = vmatprep.subr.mxu0 0.0
        %814 = vmatpush1.msra.mxu0 0.0
        %815 = vmatprep.subr.mxu0 0.0
        %816 = vmatpush1.msra.mxu0 0.0
        %817 = vmatprep.subr.mxu0 0.0
        %818 = vmatpush1.msra.mxu0 0.0
        %819 = vmatprep.subr.mxu0 0.0
        %820 = vmatpush1.msra.mxu0 0.0
        %821 = vmatprep.subr.mxu0 0.0
        %822 = vmatpush1.msra.mxu0 0.0
        %823 = vmatprep.subr.mxu0 0.0
        %824 = vmatpush1.msra.mxu0 0.0
        %825 = vmatprep.subr.mxu0 0.0
        %826 = vmatpush1.msra.mxu0 0.0
        %827 = vmatprep.subr.mxu0 0.0
        %828 = vmatpush1.msra.mxu0 %v787
        %829 = vmatprep.subr.mxu0 0.0
        %830 = vmatpush1.msra.mxu0 %v786
        %831 = vmatprep.subr.mxu0 0.0
        %832 = vmatpush2.msra.mxu0 0.0
        %833 = vmatprep.subr.mxu0 0.0
        %834 = vmatpush2.msra.mxu0 0.0
        %835 = vmatprep.subr.mxu0 0.0
        %836 = vmatpush2.msra.mxu0 0.0
        %837 = vmatprep.subr.mxu0 0.0
        %838 = vmatpush2.msra.mxu0 0.0
        %839 = vmatprep.subr.mxu0 0.0
        %840 = vmatpush2.msra.mxu0 0.0
        %841 = vmatprep.subr.mxu0 0.0
        %842 = vmatpush2.msra.mxu0 0.0
        %843 = vmatprep.subr.mxu0 0.0
        %844 = vmatpush2.msra.mxu0 0.0
        %845 = vmatprep.subr.mxu0 0.0
        %846 = vmatpush2.msra.mxu0 0.0
        %847 = vmatprep.subr.mxu0 0.0
        %848 = vmatpush2.msra.mxu0 0.0
        %849 = vmatprep.subr.mxu0 0.0
        %850 = vmatpush2.msra.mxu0 0.0
        %851 = vmatprep.subr.mxu0 0.0
        %852 = vmatpush2.msra.mxu0 0.0
        %853 = vmatprep.subr.mxu0 0.0
        %854 = vmatpush2.msra.mxu0 0.0
        %855 = vmatprep.subr.mxu0 0.0
        %856 = vmatpush2.msra.mxu0 0.0
        %857 = vmatprep.subr.mxu0 0.0
        %858 = vmatpush2.msra.mxu0 0.0
        %859 = vmatprep.subr.mxu0 0.0
        %860 = vmatpush2.msra.mxu0 0.0
        %861 = vmatprep.subr.mxu0 0.0
        %862 = vmatpush2.msra.mxu0 0.0
        %863 = vmatprep.mubr.f32.mxu0 0.0
        %864 = vmatmul.mubr.f32.gmra.mxu0 %v797
        %v865 = vpop.f32.mrf.mxu0
        %v866 = vadd.f32 %v793, %v865
        %v867 = vpop.f32.mrf.mxu0
        %868 = vdwg.mxu0
        %v869 = vmax.f32 %v866, 0.0
        %v870 = vmul.f32 %v866, 1.442695
        %v871 = vpow.pop %v870
        %873 = vrot.lane.b32.xlu0 %v777, 4
        %v874 = vpop.permute.xlu0 %873
        %v876 = vmul.f32 %v871, %v874
        %878 = vrot.lane.b32.xlu0 %v876, 124
        %v879 = vpop.permute.xlu0 %878
        %v881 = vadd.f32 %v866, %v879
        %v882 = vld [vmem:[#allocation10] sm:$0xf]
        %v883 = vld [vmem:[%s15 + $0x3] sm:$0x1]
        %v885 = vlaneseq
        %v886 = vshrl.u32 %v885, 7
        %v887 = vsub.s32 0, %v886
        %v888 = vrot.slane %v883, %v887
        %vm890 = vcmask 31744
        %v892 = vsel %vm890, %v881, 0
        %vm894 = vcmask 1043456
        %v896 = vsel %vm894, %v882, 0
        %898 = vmatprep.subr.mxu0 0.0
        %899 = vmatpush1.msra.mxu0 0.0
        %900 = vmatprep.subr.mxu0 0.0
        %901 = vmatpush1.msra.mxu0 0.0
        %902 = vmatprep.subr.mxu0 0.0
        %903 = vmatpush1.msra.mxu0 0.0
        %904 = vmatprep.subr.mxu0 0.0
        %905 = vmatpush1.msra.mxu0 0.0
        %906 = vmatprep.subr.mxu0 0.0
        %907 = vmatpush1.msra.mxu0 0.0
        %908 = vmatprep.subr.mxu0 0.0
        %909 = vmatpush1.msra.mxu0 0.0
        %910 = vmatprep.subr.mxu0 0.0
        %911 = vmatpush1.msra.mxu0 0.0
        %912 = vmatprep.subr.mxu0 0.0
        %913 = vmatpush1.msra.mxu0 0.0
        %914 = vmatprep.subr.mxu0 0.0
        %915 = vmatpush1.msra.mxu0 0.0
        %916 = vmatprep.subr.mxu0 0.0
        %917 = vmatpush1.msra.mxu0 0.0
        %918 = vmatprep.subr.mxu0 0.0
        %919 = vmatpush1.msra.mxu0 0.0
        %920 = vmatprep.subr.mxu0 0.0
        %921 = vmatpush1.msra.mxu0 0.0
        %922 = vmatprep.subr.mxu0 0.0
        %923 = vmatpush1.msra.mxu0 0.0
        %924 = vmatprep.subr.mxu0 0.0
        %925 = vmatpush1.msra.mxu0 0.0
        %926 = vmatprep.subr.mxu0 0.0
        %927 = vmatpush1.msra.mxu0 0.0
        %928 = vmatprep.subr.mxu0 0.0
        %929 = vmatpush1.msra.mxu0 %v896
        %930 = vmatprep.subr.mxu0 0.0
        %931 = vmatpush2.msra.mxu0 0.0
        %932 = vmatprep.subr.mxu0 0.0
        %933 = vmatpush2.msra.mxu0 0.0
        %934 = vmatprep.subr.mxu0 0.0
        %935 = vmatpush2.msra.mxu0 0.0
        %936 = vmatprep.subr.mxu0 0.0
        %937 = vmatpush2.msra.mxu0 0.0
        %938 = vmatprep.subr.mxu0 0.0
        %939 = vmatpush2.msra.mxu0 0.0
        %940 = vmatprep.subr.mxu0 0.0
        %941 = vmatpush2.msra.mxu0 0.0
        %942 = vmatprep.subr.mxu0 0.0
        %943 = vmatpush2.msra.mxu0 0.0
        %944 = vmatprep.subr.mxu0 0.0
        %945 = vmatpush2.msra.mxu0 0.0
        %946 = vmatprep.subr.mxu0 0.0
        %947 = vmatpush2.msra.mxu0 0.0
        %948 = vmatprep.subr.mxu0 0.0
        %949 = vmatpush2.msra.mxu0 0.0
        %950 = vmatprep.subr.mxu0 0.0
        %951 = vmatpush2.msra.mxu0 0.0
        %952 = vmatprep.subr.mxu0 0.0
        %953 = vmatpush2.msra.mxu0 0.0
        %954 = vmatprep.subr.mxu0 0.0
        %955 = vmatpush2.msra.mxu0 0.0
        %956 = vmatprep.subr.mxu0 0.0
        %957 = vmatpush2.msra.mxu0 0.0
        %958 = vmatprep.subr.mxu0 0.0
        %959 = vmatpush2.msra.mxu0 0.0
        %960 = vmatprep.subr.mxu0 0.0
        %961 = vmatpush2.msra.mxu0 0.0
        %962 = vmatprep.mubr.f32.mxu0 0.0
        %963 = vmatmul.mubr.f32.gmra.mxu0 %v892
        %v964 = vpop.f32.mrf.mxu0
        %v965 = vadd.f32 %v888, %v964
        %v966 = vpop.f32.mrf.mxu0
        %967 = vdwg.mxu0
        %v968 = vmax.f32 %v965, 0.0
        %v969 = vld [vmem:[#allocation11] sm:$0xff]
        %v970 = vld [vmem:[#allocation11 + $0x8] sm:$0xff]
        %v971 = vld [vmem:[%s15 + $0x4] sm:$0x1]
        %v973 = vlaneseq
        %v974 = vshrl.u32 %v973, 7
        %v975 = vsub.s32 0, %v974
        %v976 = vrot.slane %v971, %v975
        %v979 = vsel %vm795, %v968, 0
        %981 = vmatprep.subr.mxu0 0.0
        %982 = vmatpush1.msra.mxu0 0.0
        %983 = vmatprep.subr.mxu0 0.0
        %984 = vmatpush1.msra.mxu0 0.0
        %985 = vmatprep.subr.mxu0 0.0
        %986 = vmatpush1.msra.mxu0 0.0
        %987 = vmatprep.subr.mxu0 0.0
        %988 = vmatpush1.msra.mxu0 0.0
        %989 = vmatprep.subr.mxu0 0.0
        %990 = vmatpush1.msra.mxu0 0.0
        %991 = vmatprep.subr.mxu0 0.0
        %992 = vmatpush1.msra.mxu0 0.0
        %993 = vmatprep.subr.mxu0 0.0
        %994 = vmatpush1.msra.mxu0 0.0
        %995 = vmatprep.subr.mxu0 0.0
        %996 = vmatpush1.msra.mxu0 0.0
        %997 = vmatprep.subr.mxu0 0.0
        %998 = vmatpush1.msra.mxu0 0.0
        %999 = vmatprep.subr.mxu0 0.0
        %1000 = vmatpush1.msra.mxu0 0.0
        %1001 = vmatprep.subr.mxu0 0.0
        %1002 = vmatpush1.msra.mxu0 0.0
        %1003 = vmatprep.subr.mxu0 0.0
        %1004 = vmatpush1.msra.mxu0 0.0
        %1005 = vmatprep.subr.mxu0 0.0
        %1006 = vmatpush1.msra.mxu0 0.0
        %1007 = vmatprep.subr.mxu0 0.0
        %1008 = vmatpush1.msra.mxu0 0.0
        %1009 = vmatprep.subr.mxu0 0.0
        %1010 = vmatpush1.msra.mxu0 %v970
        %1011 = vmatprep.subr.mxu0 0.0
        %1012 = vmatpush1.msra.mxu0 %v969
        %1013 = vmatprep.subr.mxu0 0.0
        %1014 = vmatpush2.msra.mxu0 0.0
        %1015 = vmatprep.subr.mxu0 0.0
        %1016 = vmatpush2.msra.mxu0 0.0
        %1017 = vmatprep.subr.mxu0 0.0
        %1018 = vmatpush2.msra.mxu0 0.0
        %1019 = vmatprep.subr.mxu0 0.0
        %1020 = vmatpush2.msra.mxu0 0.0
        %1021 = vmatprep.subr.mxu0 0.0
        %1022 = vmatpush2.msra.mxu0 0.0
        %1023 = vmatprep.subr.mxu0 0.0
        %1024 = vmatpush2.msra.mxu0 0.0
        %1025 = vmatprep.subr.mxu0 0.0
        %1026 = vmatpush2.msra.mxu0 0.0
        %1027 = vmatprep.subr.mxu0 0.0
        %1028 = vmatpush2.msra.mxu0 0.0
        %1029 = vmatprep.subr.mxu0 0.0
        %1030 = vmatpush2.msra.mxu0 0.0
        %1031 = vmatprep.subr.mxu0 0.0
        %1032 = vmatpush2.msra.mxu0 0.0
        %1033 = vmatprep.subr.mxu0 0.0
        %1034 = vmatpush2.msra.mxu0 0.0
        %1035 = vmatprep.subr.mxu0 0.0
        %1036 = vmatpush2.msra.mxu0 0.0
        %1037 = vmatprep.subr.mxu0 0.0
        %1038 = vmatpush2.msra.mxu0 0.0
        %1039 = vmatprep.subr.mxu0 0.0
        %1040 = vmatpush2.msra.mxu0 0.0
        %1041 = vmatprep.subr.mxu0 0.0
        %1042 = vmatpush2.msra.mxu0 0.0
        %1043 = vmatprep.subr.mxu0 0.0
        %1044 = vmatpush2.msra.mxu0 0.0
        %1045 = vmatprep.mubr.f32.mxu0 0.0
        %1046 = vmatmul.mubr.f32.gmra.mxu0 %v979
        %v1047 = vpop.f32.mrf.mxu0
        %v1048 = vadd.f32 %v976, %v1047
        %v1049 = vpop.f32.mrf.mxu0
        %1050 = vdwg.mxu0
        %v1051 = vld [vmem:[#allocation13] sm:$0xff]
        %v1052 = vld [vmem:[#allocation13 + $0x8] sm:$0xff]
        %v1053 = vld [vmem:[#allocation13 + $0x10] sm:$0xff]
        %v1054 = vld [vmem:[#allocation13 + $0x18] sm:$0xff]
        %v1055 = vld [vmem:[%s15 + $0x5] sm:$0x3]
        %v1057 = vlaneseq
        %v1058 = vshrl.u32 %v1057, 7
        %v1059 = vsub.s32 0, %v1058
        %v1060 = vrot.slane %v1055, %v1059
        %v1061 = vlaneseq
        %v1062 = vshrl.u32 %v1061, 7
        %v1063 = vsub.s32 1, %v1062
        %v1064 = vrot.slane %v1055, %v1063
        %v1068 = vsel %vm795, %v1048, 0
        %1070 = vmatprep.subr.mxu0 0.0
        %1071 = vmatpush1.msra.mxu0 0.0
        %1072 = vmatprep.subr.mxu0 0.0
        %1073 = vmatpush1.msra.mxu0 0.0
        %1074 = vmatprep.subr.mxu0 0.0
        %1075 = vmatpush1.msra.mxu0 0.0
        %1076 = vmatprep.subr.mxu0 0.0
        %1077 = vmatpush1.msra.mxu0 0.0
        %1078 = vmatprep.subr.mxu0 0.0
        %1079 = vmatpush1.msra.mxu0 0.0
        %1080 = vmatprep.subr.mxu0 0.0
        %1081 = vmatpush1.msra.mxu0 0.0
        %1082 = vmatprep.subr.mxu0 0.0
        %1083 = vmatpush1.msra.mxu0 0.0
        %1084 = vmatprep.subr.mxu0 0.0
        %1085 = vmatpush1.msra.mxu0 0.0
        %1086 = vmatprep.subr.mxu0 0.0
        %1087 = vmatpush1.msra.mxu0 0.0
        %1088 = vmatprep.subr.mxu0 0.0
        %1089 = vmatpush1.msra.mxu0 0.0
        %1090 = vmatprep.subr.mxu0 0.0
        %1091 = vmatpush1.msra.mxu0 0.0
        %1092 = vmatprep.subr.mxu0 0.0
        %1093 = vmatpush1.msra.mxu0 0.0
        %1094 = vmatprep.subr.mxu0 0.0
        %1095 = vmatpush1.msra.mxu0 0.0
        %1096 = vmatprep.subr.mxu0 0.0
        %1097 = vmatpush1.msra.mxu0 0.0
        %1098 = vmatprep.subr.mxu0 %v1054
        %1099 = vmatpush1.msra.mxu0 %v1053
        %1100 = vmatprep.subr.mxu0 %v1052
        %1101 = vmatpush1.msra.mxu0 %v1051
        %1102 = vmatprep.subr.mxu0 0.0
        %1103 = vmatpush2.msra.mxu0 0.0
        %1104 = vmatprep.subr.mxu0 0.0
        %1105 = vmatpush2.msra.mxu0 0.0
        %1106 = vmatprep.subr.mxu0 0.0
        %1107 = vmatpush2.msra.mxu0 0.0
        %1108 = vmatprep.subr.mxu0 0.0
        %1109 = vmatpush2.msra.mxu0 0.0
        %1110 = vmatprep.subr.mxu0 0.0
        %1111 = vmatpush2.msra.mxu0 0.0
        %1112 = vmatprep.subr.mxu0 0.0
        %1113 = vmatpush2.msra.mxu0 0.0
        %1114 = vmatprep.subr.mxu0 0.0
        %1115 = vmatpush2.msra.mxu0 0.0
        %1116 = vmatprep.subr.mxu0 0.0
        %1117 = vmatpush2.msra.mxu0 0.0
        %1118 = vmatprep.subr.mxu0 0.0
        %1119 = vmatpush2.msra.mxu0 0.0
        %1120 = vmatprep.subr.mxu0 0.0
        %1121 = vmatpush2.msra.mxu0 0.0
        %1122 = vmatprep.subr.mxu0 0.0
        %1123 = vmatpush2.msra.mxu0 0.0
        %1124 = vmatprep.subr.mxu0 0.0
        %1125 = vmatpush2.msra.mxu0 0.0
        %1126 = vmatprep.subr.mxu0 0.0
        %1127 = vmatpush2.msra.mxu0 0.0
        %1128 = vmatprep.subr.mxu0 0.0
        %1129 = vmatpush2.msra.mxu0 0.0
        %1130 = vmatprep.subr.mxu0 0.0
        %1131 = vmatpush2.msra.mxu0 0.0
        %1132 = vmatprep.subr.mxu0 0.0
        %1133 = vmatpush2.msra.mxu0 0.0
        %1134 = vmatprep.mubr.f32.mxu0 0.0
        %1135 = vmatmul.mubr.f32.gmra.mxu0 %v1068
        %v1136 = vpop.f32.mrf.mxu0
        %v1137 = vadd.f32 %v1060, %v1136
        %v1138 = vpop.f32.mrf.mxu0
        %v1139 = vadd.f32 %v1064, %v1138
        %1140 = vdwg.mxu0
        %v1141 = vld [vmem:[%s4] sm:$0xff]
        %v1142 = vld [vmem:[%s4 + $0x8] sm:$0xff]
        %v1143 = vld [vmem:[%s4 + $0x10] sm:$0xff]
        %v1144 = vld [vmem:[%s4 + $0x18] sm:$0xff]
        %v1145 = vld [vmem:[%s15 + $0x1] sm:$0x1]
        %v1147 = vlaneseq
        %v1148 = vshrl.u32 %v1147, 7
        %v1149 = vsub.s32 0, %v1148
        %v1150 = vrot.slane %v1145, %v1149
        %1153 = vrot.lane.b32.xlu0 %v869, 120
        %v1154 = vpop.permute.xlu0 %1153
        %vm1155 = vcmask 261120
        %v1156 = vsel %vm1155, %v1154, 0
        %1158 = vmatprep.subr.mxu0 0.0
        %1159 = vmatpush1.msra.mxu0 0.0
        %1160 = vmatprep.subr.mxu0 0.0
        %1161 = vmatpush1.msra.mxu0 0.0
        %1162 = vmatprep.subr.mxu0 0.0
        %1163 = vmatpush1.msra.mxu0 0.0
        %1164 = vmatprep.subr.mxu0 0.0
        %1165 = vmatpush1.msra.mxu0 0.0
        %1166 = vmatprep.subr.mxu0 0.0
        %1167 = vmatpush1.msra.mxu0 0.0
        %1168 = vmatprep.subr.mxu0 0.0
        %1169 = vmatpush1.msra.mxu0 0.0
        %1170 = vmatprep.subr.mxu0 0.0
        %1171 = vmatpush1.msra.mxu0 0.0
        %1172 = vmatprep.subr.mxu0 0.0
        %1173 = vmatpush1.msra.mxu0 0.0
        %1174 = vmatprep.subr.mxu0 0.0
        %1175 = vmatpush1.msra.mxu0 0.0
        %1176 = vmatprep.subr.mxu0 0.0
        %1177 = vmatpush1.msra.mxu0 0.0
        %1178 = vmatprep.subr.mxu0 0.0
        %1179 = vmatpush1.msra.mxu0 0.0
        %1180 = vmatprep.subr.mxu0 0.0
        %1181 = vmatpush1.msra.mxu0 0.0
        %1182 = vmatprep.subr.mxu0 0.0
        %1183 = vmatpush1.msra.mxu0 %v1144
        %1184 = vmatprep.subr.mxu0 0.0
        %1185 = vmatpush1.msra.mxu0 %v1143
        %1186 = vmatprep.subr.mxu0 0.0
        %1187 = vmatpush1.msra.mxu0 %v1142
        %1188 = vmatprep.subr.mxu0 0.0
        %1189 = vmatpush1.msra.mxu0 %v1141
        %1190 = vmatprep.subr.mxu0 0.0
        %1191 = vmatpush2.msra.mxu0 0.0
        %1192 = vmatprep.subr.mxu0 0.0
        %1193 = vmatpush2.msra.mxu0 0.0
        %1194 = vmatprep.subr.mxu0 0.0
        %1195 = vmatpush2.msra.mxu0 0.0
        %1196 = vmatprep.subr.mxu0 0.0
        %1197 = vmatpush2.msra.mxu0 0.0
        %1198 = vmatprep.subr.mxu0 0.0
        %1199 = vmatpush2.msra.mxu0 0.0
        %1200 = vmatprep.subr.mxu0 0.0
        %1201 = vmatpush2.msra.mxu0 0.0
        %1202 = vmatprep.subr.mxu0 0.0
        %1203 = vmatpush2.msra.mxu0 0.0
        %1204 = vmatprep.subr.mxu0 0.0
        %1205 = vmatpush2.msra.mxu0 0.0
        %1206 = vmatprep.subr.mxu0 0.0
        %1207 = vmatpush2.msra.mxu0 0.0
        %1208 = vmatprep.subr.mxu0 0.0
        %1209 = vmatpush2.msra.mxu0 0.0
        %1210 = vmatprep.subr.mxu0 0.0
        %1211 = vmatpush2.msra.mxu0 0.0
        %1212 = vmatprep.subr.mxu0 0.0
        %1213 = vmatpush2.msra.mxu0 0.0
        %1214 = vmatprep.subr.mxu0 0.0
        %1215 = vmatpush2.msra.mxu0 0.0
        %1216 = vmatprep.subr.mxu0 0.0
        %1217 = vmatpush2.msra.mxu0 0.0
        %1218 = vmatprep.subr.mxu0 0.0
        %1219 = vmatpush2.msra.mxu0 0.0
        %1220 = vmatprep.subr.mxu0 0.0
        %1221 = vmatpush2.msra.mxu0 0.0
        %1222 = vmatprep.mubr.f32.mxu0 0.0
        %1223 = vmatmul.mubr.f32.gmra.mxu0 %v1156
        %v1224 = vpop.f32.mrf.mxu0
        %v1225 = vadd.f32 %v1150, %v1224
        %v1226 = vpop.f32.mrf.mxu0
        %1227 = vdwg.mxu0
        %v1228 = vld [vmem:[%s5] sm:$0xff]
        %v1229 = vld [vmem:[%s5 + $0x8] sm:$0xff]
        %v1230 = vld [vmem:[%s5 + $0x10] sm:$0xff]
        %v1231 = vld [vmem:[%s5 + $0x18] sm:$0xff]
        %v1232 = vld [vmem:[%s15 + $0x2] sm:$0x1]
        %v1234 = vlaneseq
        %v1235 = vshrl.u32 %v1234, 7
        %v1236 = vsub.s32 0, %v1235
        %v1237 = vrot.slane %v1232, %v1236
        %v1240 = vsel %vm1155, %v785, 0
        %1242 = vmatprep.subr.mxu0 0.0
        %1243 = vmatpush1.msra.mxu0 0.0
        %1244 = vmatprep.subr.mxu0 0.0
        %1245 = vmatpush1.msra.mxu0 0.0
        %1246 = vmatprep.subr.mxu0 0.0
        %1247 = vmatpush1.msra.mxu0 0.0
        %1248 = vmatprep.subr.mxu0 0.0
        %1249 = vmatpush1.msra.mxu0 0.0
        %1250 = vmatprep.subr.mxu0 0.0
        %1251 = vmatpush1.msra.mxu0 0.0
        %1252 = vmatprep.subr.mxu0 0.0
        %1253 = vmatpush1.msra.mxu0 0.0
        %1254 = vmatprep.subr.mxu0 0.0
        %1255 = vmatpush1.msra.mxu0 0.0
        %1256 = vmatprep.subr.mxu0 0.0
        %1257 = vmatpush1.msra.mxu0 0.0
        %1258 = vmatprep.subr.mxu0 0.0
        %1259 = vmatpush1.msra.mxu0 0.0
        %1260 = vmatprep.subr.mxu0 0.0
        %1261 = vmatpush1.msra.mxu0 0.0
        %1262 = vmatprep.subr.mxu0 0.0
        %1263 = vmatpush1.msra.mxu0 0.0
        %1264 = vmatprep.subr.mxu0 0.0
        %1265 = vmatpush1.msra.mxu0 0.0
        %1266 = vmatprep.subr.mxu0 0.0
        %1267 = vmatpush1.msra.mxu0 %v1231
        %1268 = vmatprep.subr.mxu0 0.0
        %1269 = vmatpush1.msra.mxu0 %v1230
        %1270 = vmatprep.subr.mxu0 0.0
        %1271 = vmatpush1.msra.mxu0 %v1229
        %1272 = vmatprep.subr.mxu0 0.0
        %1273 = vmatpush1.msra.mxu0 %v1228
        %1274 = vmatprep.subr.mxu0 0.0
        %1275 = vmatpush2.msra.mxu0 0.0
        %1276 = vmatprep.subr.mxu0 0.0
        %1277 = vmatpush2.msra.mxu0 0.0
        %1278 = vmatprep.subr.mxu0 0.0
        %1279 = vmatpush2.msra.mxu0 0.0
        %1280 = vmatprep.subr.mxu0 0.0
        %1281 = vmatpush2.msra.mxu0 0.0
        %1282 = vmatprep.subr.mxu0 0.0
        %1283 = vmatpush2.msra.mxu0 0.0
        %1284 = vmatprep.subr.mxu0 0.0
        %1285 = vmatpush2.msra.mxu0 0.0
        %1286 = vmatprep.subr.mxu0 0.0
        %1287 = vmatpush2.msra.mxu0 0.0
        %1288 = vmatprep.subr.mxu0 0.0
        %1289 = vmatpush2.msra.mxu0 0.0
        %1290 = vmatprep.subr.mxu0 0.0
        %1291 = vmatpush2.msra.mxu0 0.0
        %1292 = vmatprep.subr.mxu0 0.0
        %1293 = vmatpush2.msra.mxu0 0.0
        %1294 = vmatprep.subr.mxu0 0.0
        %1295 = vmatpush2.msra.mxu0 0.0
        %1296 = vmatprep.subr.mxu0 0.0
        %1297 = vmatpush2.msra.mxu0 0.0
        %1298 = vmatprep.subr.mxu0 0.0
        %1299 = vmatpush2.msra.mxu0 0.0
        %1300 = vmatprep.subr.mxu0 0.0
        %1301 = vmatpush2.msra.mxu0 0.0
        %1302 = vmatprep.subr.mxu0 0.0
        %1303 = vmatpush2.msra.mxu0 0.0
        %1304 = vmatprep.subr.mxu0 0.0
        %1305 = vmatpush2.msra.mxu0 0.0
        %1306 = vmatprep.mubr.f32.mxu0 0.0
        %1307 = vmatmul.mubr.f32.gmra.mxu0 %v1240
        %v1308 = vpop.f32.mrf.mxu0
        %v1309 = vadd.f32 %v1237, %v1308
        %v1310 = vpop.f32.mrf.mxu0
        %1311 = vdwg.mxu0
        %v1312 = vadd.f32 %v1225, %v1309
        %v1313 = vxor.u32 %v1312, 2147483648
        %v1314 = vmul.f32 %v1313, 1.442695
        %v1315 = vpow.pop %v1314
        %v1316 = vadd.f32 %v1315, 1.0
        %v1317 = vrcp.pop %v1316
        %v1318 = vmul.f32 1.0, %v1317
        %1320 = vrot.lane.b32.xlu0 %v1309, 64
        %v1321 = vpop.permute.xlu0 %1320
        %v1323 = vmul.f32 %v1318, %v1321
        %1325 = vrot.lane.b32.xlu0 %v1323, 64
        %v1326 = vpop.permute.xlu0 %1325
        %v1328 = vadd.f32 %v1225, %v1326
        %v1329 = vtanh.pop %v1328
        %v1330 = vsub.f32 1.0, %v1318
        %1332 = vrot.lane.b32.xlu0 %v1329, 96
        %v1333 = vpop.permute.xlu0 %1332
        %v1335 = vmul.f32 %v1330, %v1333
        %1336 = vrot.lane.b32.xlu0 %v785, 32
        %v1337 = vpop.permute.xlu0 %1336
        %v1339 = vmul.f32 %v1318, %v1337
        %v1340 = vadd.f32 %v1335, %v1339
        %1342 = vrot.lane.b32.xlu0 %v1340, 96
        %v1343 = vpop.permute.xlu0 %1342
        %1345 = vst.msk [vmem:[%s775] sm:$0xff] %vm1155, %v1343
        %1347 = vrot.lane.b32.xlu0 %v1137, 32
        %v1348 = vpop.permute.xlu0 %1347
        %v1350 = vmul.f32 %v1340, %v1348
        %1352 = vrot.lane.b32.xlu0 %v1350, 96
        %v1353 = vpop.permute.xlu0 %1352
        %v1355 = vsel %vm1155, %v1353, 0.0
        %1356 = vadd.xlane.f32.xlu0 %v1355
        %v1357 = vpop.xlane.xlu0 %1356
        %v1358 = vmul.f32 %v1340, %v1137
        %1360 = vrot.lane.b32.xlu0 %v1358, 96
        %v1361 = vpop.permute.xlu0 %1360
        %v1363 = vsel %vm1155, %v1361, 0.0
        %1364 = vadd.xlane.f32.xlu0 %v1363
        %v1365 = vpop.xlane.xlu0 %1364
        %1366 = vrot.lane.b32.xlu0 %v1137, 96
        %v1367 = vpop.permute.xlu0 %1366
        %v1369 = vmul.f32 %v1340, %v1367
        %1371 = vrot.lane.b32.xlu0 %v1369, 96
        %v1372 = vpop.permute.xlu0 %1371
        %v1374 = vsel %vm1155, %v1372, 0.0
        %1375 = vadd.xlane.f32.xlu0 %v1374
        %v1376 = vpop.xlane.xlu0 %1375
        %1377 = vrot.lane.b32.xlu0 %v1137, 64
        %v1378 = vpop.permute.xlu0 %1377
        %v1380 = vmul.f32 %v1340, %v1378
        %1382 = vrot.lane.b32.xlu0 %v1380, 96
        %v1383 = vpop.permute.xlu0 %1382
        %v1385 = vsel %vm1155, %v1383, 0.0
        %1386 = vadd.xlane.f32.xlu0 %v1385
        %v1387 = vpop.xlane.xlu0 %1386
        %1389 = vrot.lane.b32.xlu0 %v1139, 32
        %v1390 = vpop.permute.xlu0 %1389
        %v1392 = vmul.f32 %v1340, %v1390
        %1394 = vrot.lane.b32.xlu0 %v1392, 96
        %v1395 = vpop.permute.xlu0 %1394
        %v1397 = vsel %vm1155, %v1395, 0.0
        %1398 = vadd.xlane.f32.xlu0 %v1397
        %v1399 = vpop.xlane.xlu0 %1398
        %v1400 = vmul.f32 %v1340, %v1139
        %1402 = vrot.lane.b32.xlu0 %v1400, 96
        %v1403 = vpop.permute.xlu0 %1402
        %v1405 = vsel %vm1155, %v1403, 0.0
        %1406 = vadd.xlane.f32.xlu0 %v1405
        %v1407 = vpop.xlane.xlu0 %1406
        %vm1408 = vcmask 7168
        %v1409 = vsel %vm1408, %v1357, %v1365
        %vm1410 = vcmask 15360
        %v1411 = vsel %vm1410, %v1409, %v1376
        %vm1412 = vcmask 23552
        %v1413 = vsel %vm1412, %v1411, %v1387
        %v1414 = vsel %vm890, %v1413, %v1399
        %vm1415 = vcmask 39936
        %v1416 = vsel %vm1415, %v1414, %v1407
        %1417 = vrot.lane.b32.xlu0 %v1139, 64
        %v1418 = vpop.permute.xlu0 %1417
        %v1420 = vadd.f32 %v1416, %v1418
        %v1421 = vld [vmem:[#allocation14] sm:$0xff]
        %v1422 = vld [vmem:[#allocation14 + $0x8] sm:$0xff]
        %v1423 = vld [vmem:[#allocation14 + $0x10] sm:$0xff]
        %v1424 = vld [vmem:[#allocation14 + $0x18] sm:$0xff]
        %1426 = vrot.lane.b32.xlu0 %v866, 88
        %v1427 = vpop.permute.xlu0 %1426
        %v1429 = vsel %vm1155, %v1343, 0
        %1431 = vmatprep.subr.mxu0 0.0
        %1432 = vmatpush1.msra.mxu0 0.0
        %1433 = vmatprep.subr.mxu0 0.0
        %1434 = vmatpush1.msra.mxu0 0.0
        %1435 = vmatprep.subr.mxu0 0.0
        %1436 = vmatpush1.msra.mxu0 0.0
        %1437 = vmatprep.subr.mxu0 0.0
        %1438 = vmatpush1.msra.mxu0 0.0
        %1439 = vmatprep.subr.mxu0 0.0
        %1440 = vmatpush1.msra.mxu0 0.0
        %1441 = vmatprep.subr.mxu0 0.0
        %1442 = vmatpush1.msra.mxu0 0.0
        %1443 = vmatprep.subr.mxu0 0.0
        %1444 = vmatpush1.msra.mxu0 0.0
        %1445 = vmatprep.subr.mxu0 0.0
        %1446 = vmatpush1.msra.mxu0 0.0
        %1447 = vmatprep.subr.mxu0 0.0
        %1448 = vmatpush1.msra.mxu0 0.0
        %1449 = vmatprep.subr.mxu0 0.0
        %1450 = vmatpush1.msra.mxu0 0.0
        %1451 = vmatprep.subr.mxu0 0.0
        %1452 = vmatpush1.msra.mxu0 0.0
        %1453 = vmatprep.subr.mxu0 0.0
        %1454 = vmatpush1.msra.mxu0 0.0
        %1455 = vmatprep.subr.mxu0 0.0
        %1456 = vmatpush1.msra.mxu0 %v1424
        %1457 = vmatprep.subr.mxu0 0.0
        %1458 = vmatpush1.msra.mxu0 %v1423
        %1459 = vmatprep.subr.mxu0 0.0
        %1460 = vmatpush1.msra.mxu0 %v1422
        %1461 = vmatprep.subr.mxu0 0.0
        %1462 = vmatpush1.msra.mxu0 %v1421
        %1463 = vmatprep.subr.mxu0 0.0
        %1464 = vmatpush2.msra.mxu0 0.0
        %1465 = vmatprep.subr.mxu0 0.0
        %1466 = vmatpush2.msra.mxu0 0.0
        %1467 = vmatprep.subr.mxu0 0.0
        %1468 = vmatpush2.msra.mxu0 0.0
        %1469 = vmatprep.subr.mxu0 0.0
        %1470 = vmatpush2.msra.mxu0 0.0
        %1471 = vmatprep.subr.mxu0 0.0
        %1472 = vmatpush2.msra.mxu0 0.0
        %1473 = vmatprep.subr.mxu0 0.0
        %1474 = vmatpush2.msra.mxu0 0.0
        %1475 = vmatprep.subr.mxu0 0.0
        %1476 = vmatpush2.msra.mxu0 0.0
        %1477 = vmatprep.subr.mxu0 0.0
        %1478 = vmatpush2.msra.mxu0 0.0
        %1479 = vmatprep.subr.mxu0 0.0
        %1480 = vmatpush2.msra.mxu0 0.0
        %1481 = vmatprep.subr.mxu0 0.0
        %1482 = vmatpush2.msra.mxu0 0.0
        %1483 = vmatprep.subr.mxu0 0.0
        %1484 = vmatpush2.msra.mxu0 0.0
        %1485 = vmatprep.subr.mxu0 0.0
        %1486 = vmatpush2.msra.mxu0 0.0
        %1487 = vmatprep.subr.mxu0 0.0
        %1488 = vmatpush2.msra.mxu0 0.0
        %1489 = vmatprep.subr.mxu0 0.0
        %1490 = vmatpush2.msra.mxu0 0.0
        %1491 = vmatprep.subr.mxu0 0.0
        %1492 = vmatpush2.msra.mxu0 0.0
        %1493 = vmatprep.subr.mxu0 0.0
        %1494 = vmatpush2.msra.mxu0 0.0
        %1495 = vmatprep.mubr.f32.mxu0 0.0
        %1496 = vmatmul.mubr.f32.gmra.mxu0 %v1429
        %v1497 = vpop.f32.mrf.mxu0
        %v1498 = vadd.f32 %v1427, %v1497
        %v1499 = vpop.f32.mrf.mxu0
        %1500 = vdwg.mxu0
        %v1501 = vmax.f32 %v1498, 0.0
        %v1502 = vld [vmem:[%s10] sm:$0xff]
        %v1503 = vld [vmem:[%s10 + $0x8] sm:$0xff]
        %v1504 = vld [vmem:[%s10 + $0x10] sm:$0xff]
        %v1505 = vld [vmem:[%s10 + $0x18] sm:$0xff]
        %v1506 = vld [vmem:[%s15 + $0x7] sm:$0x1]
        %v1508 = vlaneseq
        %v1509 = vshrl.u32 %v1508, 7
        %v1510 = vsub.s32 0, %v1509
        %v1511 = vrot.slane %v1506, %v1510
        %v1514 = vsel %vm1155, %v1501, 0
        %1516 = vmatprep.subr.mxu0 0.0
        %1517 = vmatpush1.msra.mxu0 0.0
        %1518 = vmatprep.subr.mxu0 0.0
        %1519 = vmatpush1.msra.mxu0 0.0
        %1520 = vmatprep.subr.mxu0 0.0
        %1521 = vmatpush1.msra.mxu0 0.0
        %1522 = vmatprep.subr.mxu0 0.0
        %1523 = vmatpush1.msra.mxu0 0.0
        %1524 = vmatprep.subr.mxu0 0.0
        %1525 = vmatpush1.msra.mxu0 0.0
        %1526 = vmatprep.subr.mxu0 0.0
        %1527 = vmatpush1.msra.mxu0 0.0
        %1528 = vmatprep.subr.mxu0 0.0
        %1529 = vmatpush1.msra.mxu0 0.0
        %1530 = vmatprep.subr.mxu0 0.0
        %1531 = vmatpush1.msra.mxu0 0.0
        %1532 = vmatprep.subr.mxu0 0.0
        %1533 = vmatpush1.msra.mxu0 0.0
        %1534 = vmatprep.subr.mxu0 0.0
        %1535 = vmatpush1.msra.mxu0 0.0
        %1536 = vmatprep.subr.mxu0 0.0
        %1537 = vmatpush1.msra.mxu0 0.0
        %1538 = vmatprep.subr.mxu0 0.0
        %1539 = vmatpush1.msra.mxu0 0.0
        %1540 = vmatprep.subr.mxu0 0.0
        %1541 = vmatpush1.msra.mxu0 %v1505
        %1542 = vmatprep.subr.mxu0 0.0
        %1543 = vmatpush1.msra.mxu0 %v1504
        %1544 = vmatprep.subr.mxu0 0.0
        %1545 = vmatpush1.msra.mxu0 %v1503
        %1546 = vmatprep.subr.mxu0 0.0
        %1547 = vmatpush1.msra.mxu0 %v1502
        %1548 = vmatprep.subr.mxu0 0.0
        %1549 = vmatpush2.msra.mxu0 0.0
        %1550 = vmatprep.subr.mxu0 0.0
        %1551 = vmatpush2.msra.mxu0 0.0
        %1552 = vmatprep.subr.mxu0 0.0
        %1553 = vmatpush2.msra.mxu0 0.0
        %1554 = vmatprep.subr.mxu0 0.0
        %1555 = vmatpush2.msra.mxu0 0.0
        %1556 = vmatprep.subr.mxu0 0.0
        %1557 = vmatpush2.msra.mxu0 0.0
        %1558 = vmatprep.subr.mxu0 0.0
        %1559 = vmatpush2.msra.mxu0 0.0
        %1560 = vmatprep.subr.mxu0 0.0
        %1561 = vmatpush2.msra.mxu0 0.0
        %1562 = vmatprep.subr.mxu0 0.0
        %1563 = vmatpush2.msra.mxu0 0.0
        %1564 = vmatprep.subr.mxu0 0.0
        %1565 = vmatpush2.msra.mxu0 0.0
        %1566 = vmatprep.subr.mxu0 0.0
        %1567 = vmatpush2.msra.mxu0 0.0
        %1568 = vmatprep.subr.mxu0 0.0
        %1569 = vmatpush2.msra.mxu0 0.0
        %1570 = vmatprep.subr.mxu0 0.0
        %1571 = vmatpush2.msra.mxu0 0.0
        %1572 = vmatprep.subr.mxu0 0.0
        %1573 = vmatpush2.msra.mxu0 0.0
        %1574 = vmatprep.subr.mxu0 0.0
        %1575 = vmatpush2.msra.mxu0 0.0
        %1576 = vmatprep.subr.mxu0 0.0
        %1577 = vmatpush2.msra.mxu0 0.0
        %1578 = vmatprep.subr.mxu0 0.0
        %1579 = vmatpush2.msra.mxu0 0.0
        %1580 = vmatprep.mubr.f32.mxu0 0.0
        %1581 = vmatmul.mubr.f32.gmra.mxu0 %v1514
        %v1582 = vpop.f32.mrf.mxu0
        %v1583 = vadd.f32 %v1511, %v1582
        %v1584 = vpop.f32.mrf.mxu0
        %1585 = vdwg.mxu0
        %v1586 = vmul.f32 %v1583, 1.442695
        %v1587 = vpow.pop %v1586
        %v1588 = vmul.f32 %v1587, %v874
        %1590 = vrot.lane.b32.xlu0 %v1588, 120
        %v1591 = vpop.permute.xlu0 %1590
        %v1593 = vadd.f32 %v1583, %v1591
        %v1594 = vld [vmem:[#allocation16] sm:$0xff]
        %v1595 = vld [vmem:[%s15 + $0x8] sm:$0x1]
        %v1597 = vlaneseq
        %v1598 = vshrl.u32 %v1597, 7
        %v1599 = vsub.s32 0, %v1598
        %v1600 = vrot.slane %v1595, %v1599
        %vm1602 = vcmask 64512
        %v1604 = vsel %vm1602, %v1593, 0
        %1606 = vmatprep.subr.mxu0 0.0
        %1607 = vmatpush1.msra.mxu0 0.0
        %1608 = vmatprep.subr.mxu0 0.0
        %1609 = vmatpush1.msra.mxu0 0.0
        %1610 = vmatprep.subr.mxu0 0.0
        %1611 = vmatpush1.msra.mxu0 0.0
        %1612 = vmatprep.subr.mxu0 0.0
        %1613 = vmatpush1.msra.mxu0 0.0
        %1614 = vmatprep.subr.mxu0 0.0
        %1615 = vmatpush1.msra.mxu0 0.0
        %1616 = vmatprep.subr.mxu0 0.0
        %1617 = vmatpush1.msra.mxu0 0.0
        %1618 = vmatprep.subr.mxu0 0.0
        %1619 = vmatpush1.msra.mxu0 0.0
        %1620 = vmatprep.subr.mxu0 0.0
        %1621 = vmatpush1.msra.mxu0 0.0
        %1622 = vmatprep.subr.mxu0 0.0
        %1623 = vmatpush1.msra.mxu0 0.0
        %1624 = vmatprep.subr.mxu0 0.0
        %1625 = vmatpush1.msra.mxu0 0.0
        %1626 = vmatprep.subr.mxu0 0.0
        %1627 = vmatpush1.msra.mxu0 0.0
        %1628 = vmatprep.subr.mxu0 0.0
        %1629 = vmatpush1.msra.mxu0 0.0
        %1630 = vmatprep.subr.mxu0 0.0
        %1631 = vmatpush1.msra.mxu0 0.0
        %1632 = vmatprep.subr.mxu0 0.0
        %1633 = vmatpush1.msra.mxu0 0.0
        %1634 = vmatprep.subr.mxu0 0.0
        %1635 = vmatpush1.msra.mxu0 0.0
        %1636 = vmatprep.subr.mxu0 0.0
        %1637 = vmatpush1.msra.mxu0 %v1594
        %1638 = vmatprep.subr.mxu0 0.0
        %1639 = vmatpush2.msra.mxu0 0.0
        %1640 = vmatprep.subr.mxu0 0.0
        %1641 = vmatpush2.msra.mxu0 0.0
        %1642 = vmatprep.subr.mxu0 0.0
        %1643 = vmatpush2.msra.mxu0 0.0
        %1644 = vmatprep.subr.mxu0 0.0
        %1645 = vmatpush2.msra.mxu0 0.0
        %1646 = vmatprep.subr.mxu0 0.0
        %1647 = vmatpush2.msra.mxu0 0.0
        %1648 = vmatprep.subr.mxu0 0.0
        %1649 = vmatpush2.msra.mxu0 0.0
        %1650 = vmatprep.subr.mxu0 0.0
        %1651 = vmatpush2.msra.mxu0 0.0
        %1652 = vmatprep.subr.mxu0 0.0
        %1653 = vmatpush2.msra.mxu0 0.0
        %1654 = vmatprep.subr.mxu0 0.0
        %1655 = vmatpush2.msra.mxu0 0.0
        %1656 = vmatprep.subr.mxu0 0.0
        %1657 = vmatpush2.msra.mxu0 0.0
        %1658 = vmatprep.subr.mxu0 0.0
        %1659 = vmatpush2.msra.mxu0 0.0
        %1660 = vmatprep.subr.mxu0 0.0
        %1661 = vmatpush2.msra.mxu0 0.0
        %1662 = vmatprep.subr.mxu0 0.0
        %1663 = vmatpush2.msra.mxu0 0.0
        %1664 = vmatprep.subr.mxu0 0.0
        %1665 = vmatpush2.msra.mxu0 0.0
        %1666 = vmatprep.subr.mxu0 0.0
        %1667 = vmatpush2.msra.mxu0 0.0
        %1668 = vmatprep.subr.mxu0 0.0
        %1669 = vmatpush2.msra.mxu0 0.0
        %1670 = vmatprep.mubr.f32.mxu0 0.0
        %1671 = vmatmul.mubr.f32.gmra.mxu0 %v1604
        %v1672 = vpop.f32.mrf.mxu0
        %v1673 = vadd.f32 %v1600, %v1672
        %v1674 = vpop.f32.mrf.mxu0
        %1675 = vdwg.mxu0
        %v1676 = vmax.f32 %v1673, 0.0
        %v1677 = vld [vmem:[%s12] sm:$0xff]
        %v1678 = vld [vmem:[%s12 + $0x8] sm:$0xff]
        %v1679 = vld [vmem:[%s15 + $0x9] sm:$0x1]
        %v1681 = vlaneseq
        %v1682 = vshrl.u32 %v1681, 7
        %v1683 = vsub.s32 0, %v1682
        %v1684 = vrot.slane %v1679, %v1683
        %v1687 = vsel %vm795, %v1676, 0
        %1689 = vmatprep.subr.mxu0 0.0
        %1690 = vmatpush1.msra.mxu0 0.0
        %1691 = vmatprep.subr.mxu0 0.0
        %1692 = vmatpush1.msra.mxu0 0.0
        %1693 = vmatprep.subr.mxu0 0.0
        %1694 = vmatpush1.msra.mxu0 0.0
        %1695 = vmatprep.subr.mxu0 0.0
        %1696 = vmatpush1.msra.mxu0 0.0
        %1697 = vmatprep.subr.mxu0 0.0
        %1698 = vmatpush1.msra.mxu0 0.0
        %1699 = vmatprep.subr.mxu0 0.0
        %1700 = vmatpush1.msra.mxu0 0.0
        %1701 = vmatprep.subr.mxu0 0.0
        %1702 = vmatpush1.msra.mxu0 0.0
        %1703 = vmatprep.subr.mxu0 0.0
        %1704 = vmatpush1.msra.mxu0 0.0
        %1705 = vmatprep.subr.mxu0 0.0
        %1706 = vmatpush1.msra.mxu0 0.0
        %1707 = vmatprep.subr.mxu0 0.0
        %1708 = vmatpush1.msra.mxu0 0.0
        %1709 = vmatprep.subr.mxu0 0.0
        %1710 = vmatpush1.msra.mxu0 0.0
        %1711 = vmatprep.subr.mxu0 0.0
        %1712 = vmatpush1.msra.mxu0 0.0
        %1713 = vmatprep.subr.mxu0 0.0
        %1714 = vmatpush1.msra.mxu0 0.0
        %1715 = vmatprep.subr.mxu0 0.0
        %1716 = vmatpush1.msra.mxu0 0.0
        %1717 = vmatprep.subr.mxu0 0.0
        %1718 = vmatpush1.msra.mxu0 %v1678
        %1719 = vmatprep.subr.mxu0 0.0
        %1720 = vmatpush1.msra.mxu0 %v1677
        %1721 = vmatprep.subr.mxu0 0.0
        %1722 = vmatpush2.msra.mxu0 0.0
        %1723 = vmatprep.subr.mxu0 0.0
        %1724 = vmatpush2.msra.mxu0 0.0
        %1725 = vmatprep.subr.mxu0 0.0
        %1726 = vmatpush2.msra.mxu0 0.0
        %1727 = vmatprep.subr.mxu0 0.0
        %1728 = vmatpush2.msra.mxu0 0.0
        %1729 = vmatprep.subr.mxu0 0.0
        %1730 = vmatpush2.msra.mxu0 0.0
        %1731 = vmatprep.subr.mxu0 0.0
        %1732 = vmatpush2.msra.mxu0 0.0
        %1733 = vmatprep.subr.mxu0 0.0
        %1734 = vmatpush2.msra.mxu0 0.0
        %1735 = vmatprep.subr.mxu0 0.0
        %1736 = vmatpush2.msra.mxu0 0.0
        %1737 = vmatprep.subr.mxu0 0.0
        %1738 = vmatpush2.msra.mxu0 0.0
        %1739 = vmatprep.subr.mxu0 0.0
        %1740 = vmatpush2.msra.mxu0 0.0
        %1741 = vmatprep.subr.mxu0 0.0
        %1742 = vmatpush2.msra.mxu0 0.0
        %1743 = vmatprep.subr.mxu0 0.0
        %1744 = vmatpush2.msra.mxu0 0.0
        %1745 = vmatprep.subr.mxu0 0.0
        %1746 = vmatpush2.msra.mxu0 0.0
        %1747 = vmatprep.subr.mxu0 0.0
        %1748 = vmatpush2.msra.mxu0 0.0
        %1749 = vmatprep.subr.mxu0 0.0
        %1750 = vmatpush2.msra.mxu0 0.0
        %1751 = vmatprep.subr.mxu0 0.0
        %1752 = vmatpush2.msra.mxu0 0.0
        %1753 = vmatprep.mubr.f32.mxu0 0.0
        %1754 = vmatmul.mubr.f32.gmra.mxu0 %v1687
        %v1755 = vpop.f32.mrf.mxu0
        %v1756 = vadd.f32 %v1684, %v1755
        %v1757 = vpop.f32.mrf.mxu0
        %1758 = vdwg.mxu0
        %v1759 = vmul.f32 %v1756, 1.442695
        %v1760 = vpow.pop %v1759
        %1761 = vrot.lane.b32.xlu0 %v777, 120
        %v1762 = vpop.permute.xlu0 %1761
        %v1764 = vmul.f32 %v1760, %v1762
        %1766 = vrot.lane.b32.xlu0 %v1764, 124
        %v1767 = vpop.permute.xlu0 %1766
        %v1769 = vadd.f32 %v1756, %v1767
        %v1770 = vld [vmem:[#allocation17] sm:$0xf]
        %v1771 = vld [vmem:[%s15 + $0xa] sm:$0x1]
        %v1773 = vlaneseq
        %v1774 = vshrl.u32 %v1773, 7
        %v1775 = vsub.s32 0, %v1774
        %v1776 = vrot.slane %v1771, %v1775
        %v1779 = vsel %vm890, %v1769, 0
        %v1782 = vsel %vm894, %v1770, 0
        %1784 = vmatprep.subr.mxu0 0.0
        %1785 = vmatpush1.msra.mxu0 0.0
        %1786 = vmatprep.subr.mxu0 0.0
        %1787 = vmatpush1.msra.mxu0 0.0
        %1788 = vmatprep.subr.mxu0 0.0
        %1789 = vmatpush1.msra.mxu0 0.0
        %1790 = vmatprep.subr.mxu0 0.0
        %1791 = vmatpush1.msra.mxu0 0.0
        %1792 = vmatprep.subr.mxu0 0.0
        %1793 = vmatpush1.msra.mxu0 0.0
        %1794 = vmatprep.subr.mxu0 0.0
        %1795 = vmatpush1.msra.mxu0 0.0
        %1796 = vmatprep.subr.mxu0 0.0
        %1797 = vmatpush1.msra.mxu0 0.0
        %1798 = vmatprep.subr.mxu0 0.0
        %1799 = vmatpush1.msra.mxu0 0.0
        %1800 = vmatprep.subr.mxu0 0.0
        %1801 = vmatpush1.msra.mxu0 0.0
        %1802 = vmatprep.subr.mxu0 0.0
        %1803 = vmatpush1.msra.mxu0 0.0
        %1804 = vmatprep.subr.mxu0 0.0
        %1805 = vmatpush1.msra.mxu0 0.0
        %1806 = vmatprep.subr.mxu0 0.0
        %1807 = vmatpush1.msra.mxu0 0.0
        %1808 = vmatprep.subr.mxu0 0.0
        %1809 = vmatpush1.msra.mxu0 0.0
        %1810 = vmatprep.subr.mxu0 0.0
        %1811 = vmatpush1.msra.mxu0 0.0
        %1812 = vmatprep.subr.mxu0 0.0
        %1813 = vmatpush1.msra.mxu0 0.0
        %1814 = vmatprep.subr.mxu0 0.0
        %1815 = vmatpush1.msra.mxu0 %v1782
        %1816 = vmatprep.subr.mxu0 0.0
        %1817 = vmatpush2.msra.mxu0 0.0
        %1818 = vmatprep.subr.mxu0 0.0
        %1819 = vmatpush2.msra.mxu0 0.0
        %1820 = vmatprep.subr.mxu0 0.0
        %1821 = vmatpush2.msra.mxu0 0.0
        %1822 = vmatprep.subr.mxu0 0.0
        %1823 = vmatpush2.msra.mxu0 0.0
        %1824 = vmatprep.subr.mxu0 0.0
        %1825 = vmatpush2.msra.mxu0 0.0
        %1826 = vmatprep.subr.mxu0 0.0
        %1827 = vmatpush2.msra.mxu0 0.0
        %1828 = vmatprep.subr.mxu0 0.0
        %1829 = vmatpush2.msra.mxu0 0.0
        %1830 = vmatprep.subr.mxu0 0.0
        %1831 = vmatpush2.msra.mxu0 0.0
        %1832 = vmatprep.subr.mxu0 0.0
        %1833 = vmatpush2.msra.mxu0 0.0
        %1834 = vmatprep.subr.mxu0 0.0
        %1835 = vmatpush2.msra.mxu0 0.0
        %1836 = vmatprep.subr.mxu0 0.0
        %1837 = vmatpush2.msra.mxu0 0.0
        %1838 = vmatprep.subr.mxu0 0.0
        %1839 = vmatpush2.msra.mxu0 0.0
        %1840 = vmatprep.subr.mxu0 0.0
        %1841 = vmatpush2.msra.mxu0 0.0
        %1842 = vmatprep.subr.mxu0 0.0
        %1843 = vmatpush2.msra.mxu0 0.0
        %1844 = vmatprep.subr.mxu0 0.0
        %1845 = vmatpush2.msra.mxu0 0.0
        %1846 = vmatprep.subr.mxu0 0.0
        %1847 = vmatpush2.msra.mxu0 0.0
        %1848 = vmatprep.mubr.f32.mxu0 0.0
        %1849 = vmatmul.mubr.f32.gmra.mxu0 %v1779
        %v1850 = vpop.f32.mrf.mxu0
        %v1851 = vadd.f32 %v1776, %v1850
        %v1852 = vpop.f32.mrf.mxu0
        %1853 = vdwg.mxu0
        %v1854 = vmax.f32 %v1851, 0.0
        %v1855 = vld [vmem:[#allocation19] sm:$0xff]
        %v1856 = vld [vmem:[%s15 + $0xb] sm:$0x1]
        %v1858 = vlaneseq
        %v1859 = vshrl.u32 %v1858, 7
        %v1860 = vsub.s32 0, %v1859
        %v1861 = vrot.slane %v1856, %v1860
        %v1864 = vsel %vm1602, %v1854, 0
        %1866 = vmatprep.subr.mxu0 0.0
        %1867 = vmatpush1.msra.mxu0 0.0
        %1868 = vmatprep.subr.mxu0 0.0
        %1869 = vmatpush1.msra.mxu0 0.0
        %1870 = vmatprep.subr.mxu0 0.0
        %1871 = vmatpush1.msra.mxu0 0.0
        %1872 = vmatprep.subr.mxu0 0.0
        %1873 = vmatpush1.msra.mxu0 0.0
        %1874 = vmatprep.subr.mxu0 0.0
        %1875 = vmatpush1.msra.mxu0 0.0
        %1876 = vmatprep.subr.mxu0 0.0
        %1877 = vmatpush1.msra.mxu0 0.0
        %1878 = vmatprep.subr.mxu0 0.0
        %1879 = vmatpush1.msra.mxu0 0.0
        %1880 = vmatprep.subr.mxu0 0.0
        %1881 = vmatpush1.msra.mxu0 0.0
        %1882 = vmatprep.subr.mxu0 0.0
        %1883 = vmatpush1.msra.mxu0 0.0
        %1884 = vmatprep.subr.mxu0 0.0
        %1885 = vmatpush1.msra.mxu0 0.0
        %1886 = vmatprep.subr.mxu0 0.0
        %1887 = vmatpush1.msra.mxu0 0.0
        %1888 = vmatprep.subr.mxu0 0.0
        %1889 = vmatpush1.msra.mxu0 0.0
        %1890 = vmatprep.subr.mxu0 0.0
        %1891 = vmatpush1.msra.mxu0 0.0
        %1892 = vmatprep.subr.mxu0 0.0
        %1893 = vmatpush1.msra.mxu0 0.0
        %1894 = vmatprep.subr.mxu0 0.0
        %1895 = vmatpush1.msra.mxu0 0.0
        %1896 = vmatprep.subr.mxu0 0.0
        %1897 = vmatpush1.msra.mxu0 %v1855
        %1898 = vmatprep.subr.mxu0 0.0
        %1899 = vmatpush2.msra.mxu0 0.0
        %1900 = vmatprep.subr.mxu0 0.0
        %1901 = vmatpush2.msra.mxu0 0.0
        %1902 = vmatprep.subr.mxu0 0.0
        %1903 = vmatpush2.msra.mxu0 0.0
        %1904 = vmatprep.subr.mxu0 0.0
        %1905 = vmatpush2.msra.mxu0 0.0
        %1906 = vmatprep.subr.mxu0 0.0
        %1907 = vmatpush2.msra.mxu0 0.0
        %1908 = vmatprep.subr.mxu0 0.0
        %1909 = vmatpush2.msra.mxu0 0.0
        %1910 = vmatprep.subr.mxu0 0.0
        %1911 = vmatpush2.msra.mxu0 0.0
        %1912 = vmatprep.subr.mxu0 0.0
        %1913 = vmatpush2.msra.mxu0 0.0
        %1914 = vmatprep.subr.mxu0 0.0
        %1915 = vmatpush2.msra.mxu0 0.0
        %1916 = vmatprep.subr.mxu0 0.0
        %1917 = vmatpush2.msra.mxu0 0.0
        %1918 = vmatprep.subr.mxu0 0.0
        %1919 = vmatpush2.msra.mxu0 0.0
        %1920 = vmatprep.subr.mxu0 0.0
        %1921 = vmatpush2.msra.mxu0 0.0
        %1922 = vmatprep.subr.mxu0 0.0
        %1923 = vmatpush2.msra.mxu0 0.0
        %1924 = vmatprep.subr.mxu0 0.0
        %1925 = vmatpush2.msra.mxu0 0.0
        %1926 = vmatprep.subr.mxu0 0.0
        %1927 = vmatpush2.msra.mxu0 0.0
        %1928 = vmatprep.subr.mxu0 0.0
        %1929 = vmatpush2.msra.mxu0 0.0
        %1930 = vmatprep.mubr.f32.mxu0 0.0
        %1931 = vmatmul.mubr.f32.gmra.mxu0 %v1864
        %v1932 = vpop.f32.mrf.mxu0
        %v1933 = vadd.f32 %v1861, %v1932
        %v1934 = vpop.f32.mrf.mxu0
        %1935 = vdwg.mxu0
        %v1936 = vadd.f32 %v1756, 0.9189385
        %v1937 = vmul.f32 %v871, %v871
        %v1938 = vsub.f32 %v866, %v1756
        %v1939 = vmul.f32 %v1938, %v1938
        %1941 = vrot.lane.b32.xlu0 %v1939, 4
        %v1942 = vpop.permute.xlu0 %1941
        %v1944 = vadd.f32 %v1937, %v1942
        %v1945 = vmul.f32 %v1944, 0.5
        %v1946 = vmul.f32 %v1756, -2.0
        %v1947 = vmul.f32 %v1946, 1.442695
        %v1948 = vpow.pop %v1947
        %v1949 = vmul.f32 %v1945, %v1948
        %v1950 = vadd.f32 %v1936, %v1949
        %v1951 = vsub.f32 %v1933, %v1583
        %v1952 = vmul.f32 %v1587, %v1587
        %v1953 = vsub.f32 %v1583, %v1933
        %v1954 = vmul.f32 %v1953, %v1953
        %1956 = vrot.lane.b32.xlu0 %v1954, 8
        %v1957 = vpop.permute.xlu0 %1956
        %v1959 = vadd.f32 %v1952, %v1957
        %v1960 = vmul.f32 %v1959, 0.5
        %v1961 = vmul.f32 %v1933, -2.0
        %v1962 = vmul.f32 %v1961, 1.442695
        %v1963 = vpow.pop %v1962
        %v1964 = vmul.f32 %v1960, %v1963
        %v1965 = vadd.f32 %v1951, %v1964
        %v1966 = vsub.f32 %v1965, 0.5
        %1968 = vrot.lane.b32.xlu0 %v1950, 124
        %v1969 = vpop.permute.xlu0 %1968
        %v1971 = vsel %vm890, %v1969, 0.0
        %1972 = vadd.xlane.f32.xlu0 %v1971
        %v1973 = vpop.xlane.xlu0 %1972
        %v1974 = vmul.f32 %v1973, 0.01
        %1976 = vrot.lane.b32.xlu0 %v1966, 120
        %v1977 = vpop.permute.xlu0 %1976
        %v1979 = vsel %vm1602, %v1977, 0.0
        %1980 = vadd.xlane.f32.xlu0 %v1979
        %v1981 = vpop.xlane.xlu0 %1980
        %v1982 = vmul.f32 %v1981, 0.1
        %v1983 = vadd.f32 %v1974, %v1982
        %1984 = vrot.lane.b32.xlu0 %v1340, 102
        %v1985 = vpop.permute.xlu0 %1984
        %vm1987 = vcmask 48128
        %v1988 = vsel %vm1987, %v1420, %v1985
        %vm1989 = vcmask 310272
        %v1990 = vsel %vm1989, %v1988, %v1983
        %vm1991 = vcmask 318464
        %1992 = vst.msk [vmem:[%s768] sm:$0xff] %vm1991, %v1990
        %s1993 = sand.u32 %s422, 1
        %s1994 = scalar_lea.sflag [#allocation4], %s1993
        %s1995 = sand.u32 %s422, 1
        %s1996 = smul.addr %s1995, 8
        %s1997 = scalar_lea.vmem [#allocation20], %s1996
        %s1998 = sand.u32 %s448, 1
        %s1999 = scalar_lea.sflag [#allocation22], %s1998
        %s2000 = sand.u32 %s448, 1
        %s2001 = smul.addr %s2000, 8
        %s2002 = scalar_lea.vmem [#allocation21], %s2001
        // Predicated region
        $region133: #{tpu_custom_call.1} parent=83 // pred_check
          %p2003 = pneg %p432
        $region134: #{tpu_custom_call.1} parent=83 // pred_check_branch
          %2005 = sbr.rel (%p2003) target = $region136
        $region135: #{tpu_custom_call.1} parent=83 // pred_region
          %s2007 = ssub.s32 128, 128
          %2008 = vsyncadd %s1994, %s2007
          %s2009 = smul.addr %s50, 2
          %s2010 = sadd.s32 %s49, %s2009
          %s2011 = smul.addr %s2010, 128
          %s2012 = scalar_lea.hbm %s16, %s2011
          %s2014 = sshll.u32 %s1997, 4
          %s2015 = int_to_ptr.vmem [resolvable:$true] %s2014
          %2017 = dma.vmem_to_hbm [thread:$0]  %s2015, 128, %s2012, %s1994
        $region136: #{tpu_custom_call.1} parent=83 // pred_fallthru
          _
        // Predicated region
        $region137: #{tpu_custom_call.1} parent=83 // pred_check
          %p2018 = pneg %p458
        $region138: #{tpu_custom_call.1} parent=83 // pred_check_branch
          %2020 = sbr.rel (%p2018) target = $region140
        $region139: #{tpu_custom_call.1} parent=83 // pred_region
          %s2022 = ssub.s32 128, 128
          %2023 = vsyncadd %s1999, %s2022
          %s2024 = smul.addr %s49, 128
          %s2025 = scalar_lea.hbm %s17, %s2024
          %s2027 = sshll.u32 %s2002, 4
          %s2028 = int_to_ptr.vmem [resolvable:$true] %s2027
          %2030 = dma.vmem_to_hbm [thread:$0]  %s2028, 128, %s2025, %s1999
        $region140: #{tpu_custom_call.1} parent=83 // pred_fallthru
          _
      $region84: #{tpu_custom_call.1} parent=5 // pred_fallthru
        _
      %p2031 = scmp.le.s32.totalorder 2, %s40
      // Predicated region
      $region141: #{tpu_custom_call.1} parent=5 // pred_check
        %p2032 = pneg %p2031
      $region142: #{tpu_custom_call.1} parent=5 // pred_check_branch
        %2034 = sbr.rel (%p2032) target = $region144
      $region143: #{tpu_custom_call.1} parent=5 // pred_region
        %s2035 = ssub.s32 %s40, 2
        // Predicated region
        $region145: #{tpu_custom_call.1} parent=143 // pred_check
          %p2036 = pneg %p438
        $region146: #{tpu_custom_call.1} parent=143 // pred_check_branch
          %2038 = sbr.rel (%p2036) target = $region148
        $region147: #{tpu_custom_call.1} parent=143 // pred_region
          %s2039 = sand.u32 %s423, 1
          %s2040 = scalar_lea.sflag [#allocation4], %s2039
          %s2041 = sand.u32 %s423, 1
          %s2042 = smul.addr %s2041, 8
          %s2043 = scalar_lea.vmem [#allocation20], %s2042
          %2044 = dma.done %s2040, 128
        $region148: #{tpu_custom_call.1} parent=143 // pred_fallthru
          _
        // Predicated region
        $region149: #{tpu_custom_call.1} parent=143 // pred_check
          %p2045 = pneg %p464
        $region150: #{tpu_custom_call.1} parent=143 // pred_check_branch
          %2047 = sbr.rel (%p2045) target = $region152
        $region151: #{tpu_custom_call.1} parent=143 // pred_region
          %s2048 = sand.u32 %s449, 1
          %s2049 = scalar_lea.sflag [#allocation22], %s2048
          %s2050 = sand.u32 %s449, 1
          %s2051 = smul.addr %s2050, 8
          %s2052 = scalar_lea.vmem [#allocation21], %s2051
          %2053 = dma.done %s2049, 128
        $region152: #{tpu_custom_call.1} parent=143 // pred_fallthru
          _
      $region144: #{tpu_custom_call.1} parent=5 // pred_fallthru
        _
    $region6: #{tpu_custom_call.1} parent=1 // loop_footer
      %s44 = sadd.s32 1, %s40
    $region7: #{tpu_custom_call.1} parent=1 // loop_footer_branch
      %39 = sbr.rel target = $region3
    $region8: #{tpu_custom_call.1} parent=1 // loop_exit
      _
    %2054 = vsyncpa [#allocation3], 1
    %s2055 = scalar_lea.sflag [#allocation3], 1
    %2056 = vsyncpa %s2055, 1
    %2057 = vsyncpa [#allocation6], 1
    %s2058 = scalar_lea.sflag [#allocation6], 1
    %2059 = vsyncpa %s2058, 1
    %2060 = vsyncpa [#allocation9], 1
    %2061 = vsyncpa [#allocation12], 1
    %2062 = vsyncpa [#allocation15], 1
    %2063 = vsyncpa [#allocation18], 1
    %2064 = vsyncpa [#allocation4], 1
    %s2065 = scalar_lea.sflag [#allocation4], 1
    %2066 = vsyncpa %s2065, 1
    %2067 = vsyncpa [#allocation22], 1
    %s2068 = scalar_lea.sflag [#allocation22], 1
    %2069 = vsyncpa %s2068, 1

</llo_original>
